<compile_context>
chip_gen: v5e
topology: v5e:2x2
jax: 0.10.0
libtpu: 0.0.40
codegen_flags: <defaults>
</compile_context>

<pallas_src>
import functools

import jax
import jax.numpy as jnp
from jax.experimental import pallas as pl
from jax.experimental.pallas import tpu as pltpu


def _round_up(x, m):
    return (x + m - 1) // m * m


# --------------------------------------------------------------------------- #
# Kernels
# --------------------------------------------------------------------------- #
def _layer_norm(z, gamma, beta, *, true_d, eps, mask_cols):
    """LayerNorm over the last dim; only the first `true_d` columns are real.

    Padded columns of z are exactly zero (zero-padded x / weights / biases), so the
    mean is a plain sum.  Variance is two-pass (centered) for stability; padded
    columns of the centered values are masked only when D is misaligned.
    """
    inv_d = 1.0 / float(true_d)
    mean = jnp.sum(z, axis=-1, keepdims=True) * inv_d
    centered = z - mean
    if mask_cols:  # static switch -> zero cost when D % 128 == 0
        col = jax.lax.broadcasted_iota(jnp.int32, z.shape, z.ndim - 1)
        centered = jnp.where(col < true_d, centered, 0.0)
    var = jnp.sum(centered * centered, axis=-1, keepdims=True) * inv_d
    inv = jax.lax.rsqrt(var + eps)  # EUP
    return centered * (inv * gamma) + beta


def _san_resident_kernel(x_ref, w_up_ref, b_up_ref, w_dn_ref, b_dn_ref,
                         gamma_ref, beta_ref, o_ref, *, true_d, eps, mask_cols):
    """Weights fully resident in VMEM; 1-D row grid (parallel)."""
    x = x_ref[...].astype(jnp.float32)                       # [TN, Dp]
    h = jnp.dot(x.astype(w_up_ref.dtype), w_up_ref[...],
                preferred_element_type=jnp.float32)          # [TN, Hp]
    h = jnp.maximum(h + b_up_ref[...], 0.0)
    y = jnp.dot(h.astype(w_dn_ref.dtype), w_dn_ref[...],
                preferred_element_type=jnp.float32)          # [TN, Dp]
    z = y + b_dn_ref[...] + x
    out = _layer_norm(z, gamma_ref[...], beta_ref[...],
                      true_d=true_d, eps=eps, mask_cols=mask_cols)
    o_ref[...] = out.astype(o_ref.dtype)


def _san_htiled_kernel(x_ref, w_up_ref, b_up_ref, w_dn_ref, b_dn_ref,
                       gamma_ref, beta_ref, o_ref, acc_ref,
                       *, true_d, eps, mask_cols):
    """Hidden dim streamed in chunks (last, 'arbitrary' grid axis); f32 accumulator."""
    h_idx = pl.program_id(1)

    @pl.when(h_idx == 0)
    def _():
        acc_ref[...] = jnp.zeros_like(acc_ref)

    x = x_ref[...].astype(jnp.float32)                       # [TN, Dp]
    h = jnp.dot(x.astype(w_up_ref.dtype), w_up_ref[...],
                preferred_element_type=jnp.float32)          # [TN, TH]
    h = jnp.maximum(h + b_up_ref[...], 0.0)
    acc_ref[...] += jnp.dot(h.astype(w_dn_ref.dtype), w_dn_ref[...],
                            preferred_element_type=jnp.float32)

    @pl.when(h_idx == pl.num_programs(1) - 1)
    def _():
        z = acc_ref[...] + b_dn_ref[...] + x
        out = _layer_norm(z, gamma_ref[...], beta_ref[...],
                          true_d=true_d, eps=eps, mask_cols=mask_cols)
        o_ref[...] = out.astype(o_ref.dtype)


# --------------------------------------------------------------------------- #
# Host-side wrappers
# --------------------------------------------------------------------------- #
def prepare_san_params(w_up, b_up, w_dn, b_dn, gamma, beta,
                       *, matmul_dtype=jnp.bfloat16):
    """Pad + cast parameters ONCE (hoisted out of the per-forward path).

    w_up: [D, 2D], w_dn: [2D, D]  (transposed vs. torch nn.Linear.weight).
    """
    D, H = w_up.shape
    assert w_dn.shape == (H, D)
    D_pad = _round_up(D, 128)
    H_pad = _round_up(H, 128)
    return {
        "w_up": jnp.pad(w_up, ((0, D_pad - D), (0, H_pad - H))).astype(matmul_dtype),
        "w_dn": jnp.pad(w_dn, ((0, H_pad - H), (0, D_pad - D))).astype(matmul_dtype),
        "b_up": jnp.pad(b_up, (0, H_pad - H)).reshape(1, H_pad).astype(jnp.float32),
        "b_dn": jnp.pad(b_dn, (0, D_pad - D)).reshape(1, D_pad).astype(jnp.float32),
        "gamma": jnp.pad(gamma, (0, D_pad - D)).reshape(1, D_pad).astype(jnp.float32),
        "beta": jnp.pad(beta, (0, D_pad - D)).reshape(1, D_pad).astype(jnp.float32),
        "true_d": D, "d_pad": D_pad, "true_h": H, "h_pad": H_pad,
    }


def _vmem_budget_bytes():
    try:
        cap = int(pltpu.get_tpu_info().vmem_capacity_bytes)
    except Exception:
        cap = 64 << 20  # conservative (v7x-sized) fallback
    return int(cap * 0.80)


def san_block(hidden_states, params, *, row_tile=512, h_tile=1024, eps=1e-5,
              force_h_tiling=False):
    """hidden_states: [B, S, D].  `params` from prepare_san_params()."""
    B, S, D = hidden_states.shape
    assert D == params["true_d"]
    D_pad, H_pad = params["d_pad"], params["h_pad"]
    N = B * S
    mask_cols = D_pad != D
    x_bytes = jnp.dtype(hidden_states.dtype).itemsize
    w_bytes = jnp.dtype(params["w_up"].dtype).itemsize
    budget = _vmem_budget_bytes()

    x2d = hidden_states.reshape(N, D)
    if mask_cols:  # only pad (extra HBM round trip) when D is genuinely misaligned
        x2d = jnp.pad(x2d, ((0, 0), (0, D_pad - D)))

    # Row tile: multiple of 8, small enough that the parallel grid has ~>=8 steps
    # (both v7x TensorCores get work and x/out DMA overlaps compute).
    tn = min(row_tile, max(8, _round_up(pl.cdiv(N, 8), 8)))
    tn = max(8, _round_up(tn, 8))

    def resident_need(tn_, single_w):
        w_buf = 1 if single_w else 2
        return (w_buf * 2 * D_pad * H_pad * w_bytes           # w_up + w_dn
                + (H_pad + 3 * D_pad) * 4                     # bias / LN vectors
                + 2 * tn_ * D_pad * x_bytes * 2               # x / out tiles (dbl-buffered)
                + 2 * tn_ * H_pad * 4)                        # h intermediate headroom

    def htiled_need(tn_, th_):
        return (2 * 2 * D_pad * th_ * w_bytes                 # streamed w_up / w_dn chunks
                + 2 * th_ * 4 + 3 * D_pad * 4                 # b_up chunks + vectors
                + 2 * tn_ * D_pad * x_bytes * 2               # x / out tiles
                + tn_ * D_pad * 4                             # f32 accumulator scratch
                + 2 * tn_ * th_ * 4)                          # h intermediate headroom

    use_resident = not force_h_tiling
    if use_resident:
        while tn > 8 and resident_need(tn, True) > budget:
            tn = max(8, _round_up(tn // 2, 8))
        use_resident = resident_need(tn, True) <= budget

    th = None
    if not use_resident:
        th = next((c for c in (4096, 2048, 1024, 512, 256, 128)
                   if c <= max(h_tile, 128) and H_pad % c == 0), 128)
        while (th > 128 or tn > 8) and htiled_need(tn, th) > budget:
            if th > 128:
                th //= 2
                if H_pad % th:
                    th = 128
            else:
                tn = max(8, _round_up(tn // 2, 8))

    grid_rows = pl.cdiv(N, tn)

    cost = pl.CostEstimate(
        flops=int(4 * N * D_pad * H_pad),
        transcendentals=int(N),
        bytes_accessed=int(2 * N * D_pad * x_bytes
                           + 2 * D_pad * H_pad * w_bytes
                           + (H_pad + 3 * D_pad) * 4),
    )
    out_shape = jax.ShapeDtypeStruct((N, D_pad), hidden_states.dtype)
    kernel_kwargs = dict(true_d=D, eps=eps, mask_cols=mask_cols)

    def build(single_w):
        if use_resident:
            def cspec(shape):
                if single_w:
                    return pl.BlockSpec(shape, lambda i: (0, 0),
                                        pipeline_mode=pl.Buffered(1))
                return pl.BlockSpec(shape, lambda i: (0, 0))
            need = resident_need(tn, single_w)
            kernel = functools.partial(_san_resident_kernel, **kernel_kwargs)
            grid = (grid_rows,)
            in_specs = [
                pl.BlockSpec((tn, D_pad), lambda i: (i, 0)),       # x: streamed
                cspec((D_pad, H_pad)),                             # w_up: resident
                cspec((1, H_pad)),                                 # b_up
                cspec((H_pad, D_pad)),                             # w_dn: resident
                cspec((1, D_pad)),                                 # b_dn
                cspec((1, D_pad)),                                 # gamma
                cspec((1, D_pad)),                                 # beta
            ]
            out_specs = pl.BlockSpec((tn, D_pad), lambda i: (i, 0))
            scratch = []
            semantics = ("parallel",)
        else:
            def cspec(shape):
                if single_w:
                    return pl.BlockSpec(shape, lambda i, h: (0, 0),
                                        pipeline_mode=pl.Buffered(1))
                return pl.BlockSpec(shape, lambda i, h: (0, 0))
            need = htiled_need(tn, th)
            kernel = functools.partial(_san_htiled_kernel, **kernel_kwargs)
            grid = (grid_rows, H_pad // th)
            in_specs = [
                pl.BlockSpec((tn, D_pad), lambda i, h: (i, 0)),    # x: per row tile
                pl.BlockSpec((D_pad, th), lambda i, h: (0, h)),    # w_up chunk (streamed)
                pl.BlockSpec((1, th), lambda i, h: (0, h)),        # b_up chunk
                pl.BlockSpec((th, D_pad), lambda i, h: (h, 0)),    # w_dn chunk (streamed)
                cspec((1, D_pad)),                                 # b_dn
                cspec((1, D_pad)),                                 # gamma
                cspec((1, D_pad)),                                 # beta
            ]
            out_specs = pl.BlockSpec((tn, D_pad), lambda i, h: (i, 0))
            scratch = [pltpu.VMEM((tn, D_pad), jnp.float32)]
            semantics = ("parallel", "arbitrary")

        vmem_limit = int(min(max(need * 5 // 4, 32 << 20), budget))
        return pl.pallas_call(
            kernel,
            out_shape=out_shape,
            grid=grid,
            in_specs=in_specs,
            out_specs=out_specs,
            scratch_shapes=scratch,
            compiler_params=pltpu.CompilerParams(
                dimension_semantics=semantics,
                vmem_limit_bytes=vmem_limit,
            ),
            cost_estimate=cost,
        )

    args = (x2d, params["w_up"], params["b_up"], params["w_dn"],
            params["b_dn"], params["gamma"], params["beta"])
    try:
        out2d = build(True)(*args)
    except Exception:
        # Fallback if this JAX build rejects pl.Buffered(1) single-buffering.
        out2d = build(False)(*args)

    if mask_cols:
        out2d = out2d[:, :D]
    return out2d.reshape(B, S, D)


# --------------------------------------------------------------------------- #
# References (pure JAX) and self-test
# --------------------------------------------------------------------------- #
def torch_like_reference(x3d, w_up, b_up, w_dn, b_dn, gamma, beta, eps=1e-5):
    x2d = x3d.reshape(-1, x3d.shape[-1])
    h = jnp.maximum(x2d @ w_up + b_up, 0.0)
    y = h @ w_dn + b_dn
    z = y + x2d
    m = jnp.mean(z, -1, keepdims=True)
    v = jnp.mean((z - m) ** 2, -1, keepdims=True)
    return ((z - m) * jax.lax.rsqrt(v + eps) * gamma + beta).reshape(x3d.shape)


def mixed_precision_reference(x3d, w_up, b_up, w_dn, b_dn, gamma, beta, eps=1e-5):
    x2d = x3d.reshape(-1, x3d.shape[-1])
    h = jnp.dot(x2d.astype(jnp.bfloat16), w_up.astype(jnp.bfloat16),
                preferred_element_type=jnp.float32) + b_up
    h = jnp.maximum(h, 0.0)
    y = jnp.dot(h.astype(jnp.bfloat16), w_dn.astype(jnp.bfloat16),
                preferred_element_type=jnp.float32) + b_dn
    z = y + x2d
    m = jnp.mean(z, -1, keepdims=True)
    v = jnp.mean((z - m) ** 2, -1, keepdims=True)
    return ((z - m) * jax.lax.rsqrt(v + eps) * gamma + beta).reshape(x3d.shape)


if __name__ == "__main__":
    # --- Test 1: small misaligned D (padded / masked columns), resident-weight path ---
    B, S, D = 2, 8, 32
    key = jax.random.PRNGKey(0)
    k_x, k_wu, k_bu, k_wd, k_bd = jax.random.split(key, 5)
    x = jax.random.normal(k_x, (B, S, D), dtype=jnp.float32)
    # nn.Linear(D, 2D): torch weight [2D, D] -> stored transposed as [D, 2D].
    w_up = jax.random.normal(k_wu, (D, 2 * D), dtype=jnp.float32) * 0.05
    b_up = jax.random.normal(k_bu, (2 * D,), dtype=jnp.float32) * 0.05
    # nn.Linear(2D, D): torch weight [D, 2D] -> stored transposed as [2D, D].
    w_dn = jax.random.normal(k_wd, (2 * D, D), dtype=jnp.float32) * 0.05
    b_dn = jax.random.normal(k_bd, (D,), dtype=jnp.float32) * 0.05
    gamma = jnp.ones((D,), dtype=jnp.float32)      # nn.LayerNorm default affine init
    beta = jnp.zeros((D,), dtype=jnp.float32)

    params = prepare_san_params(w_up, b_up, w_dn, b_dn, gamma, beta)
    out = san_block(x, params)
    jax.block_until_ready(out)

    ref_mixed = mixed_precision_reference(x, w_up, b_up, w_dn, b_dn, gamma, beta)
    ref_f32 = torch_like_reference(x, w_up, b_up, w_dn, b_dn, gamma, beta)
    assert jnp.allclose(out, ref_mixed, atol=5e-3, rtol=5e-3), \
        "resident path: mismatch vs mixed-precision reference"
    assert jnp.allclose(out, ref_f32, atol=5e-2, rtol=5e-2), \
        "resident path: mismatch vs f32 reference"

    # --- Test 2: D aligned to 128 (no padding), forced H-tiled accumulator path ---
    B2, S2, D2 = 2, 8, 128
    k2 = jax.random.PRNGKey(1)
    k_x2, k_wu2, k_bu2, k_wd2, k_bd2 = jax.random.split(k2, 5)
    x2 = jax.random.normal(k_x2, (B2, S2, D2), dtype=jnp.float32)
    w_up2 = jax.random.normal(k_wu2, (D2, 2 * D2), dtype=jnp.float32) * 0.03
    b_up2 = jax.random.normal(k_bu2, (2 * D2,), dtype=jnp.float32) * 0.03
    w_dn2 = jax.random.normal(k_wd2, (2 * D2, D2), dtype=jnp.float32) * 0.03
    b_dn2 = jax.random.normal(k_bd2, (D2,), dtype=jnp.float32) * 0.03
    gamma2 = jnp.ones((D2,), dtype=jnp.float32)
    beta2 = jnp.zeros((D2,), dtype=jnp.float32)

    params2 = prepare_san_params(w_up2, b_up2, w_dn2, b_dn2, gamma2, beta2)
    out2 = san_block(x2, params2, force_h_tiling=True, h_tile=128)  # 2 H-chunks
    jax.block_until_ready(out2)

    ref2_mixed = mixed_precision_reference(x2, w_up2, b_up2, w_dn2, b_dn2, gamma2, beta2)
    ref2_f32 = torch_like_reference(x2, w_up2, b_up2, w_dn2, b_dn2, gamma2, beta2)
    assert jnp.allclose(out2, ref2_mixed, atol=1e-2, rtol=1e-2), \
        "H-tiled path: mismatch vs mixed-precision reference"
    assert jnp.allclose(out2, ref2_f32, atol=5e-2, rtol=5e-2), \
        "H-tiled path: mismatch vs f32 reference"

    print("KERNEL_OK")
</pallas_src>

<mosaic_0001>
module attributes {stable_mosaic.version = 11 : i64} {
  func.func @_san_resident_kernel(%arg0: i32, %arg1: memref<8x128xf32, #tpu.memory_space<vmem>>, %arg2: memref<128x128xbf16, #tpu.memory_space<vmem>>, %arg3: memref<1x128xf32, #tpu.memory_space<vmem>>, %arg4: memref<128x128xbf16, #tpu.memory_space<vmem>>, %arg5: memref<1x128xf32, #tpu.memory_space<vmem>>, %arg6: memref<1x128xf32, #tpu.memory_space<vmem>>, %arg7: memref<1x128xf32, #tpu.memory_space<vmem>>, %arg8: memref<8x128xf32, #tpu.memory_space<vmem>>) attributes {dimension_semantics = [#tpu.dimension_semantics<parallel>], iteration_bounds = array<i64: 2>, scalar_prefetch = 0 : i64, scratch_operands = 0 : i64, tpu.core_type = #tpu.core_type<tc>, window_params = [{transform_indices = @transform_0, window_bounds = array<i64: 8, 128>}, {pipeline_mode = #tpu.pipeline_mode<synchronous>, transform_indices = @transform_1, window_bounds = array<i64: 128, 128>}, {pipeline_mode = #tpu.pipeline_mode<synchronous>, transform_indices = @transform_2, window_bounds = array<i64: 1, 128>}, {pipeline_mode = #tpu.pipeline_mode<synchronous>, transform_indices = @transform_3, window_bounds = array<i64: 128, 128>}, {pipeline_mode = #tpu.pipeline_mode<synchronous>, transform_indices = @transform_4, window_bounds = array<i64: 1, 128>}, {pipeline_mode = #tpu.pipeline_mode<synchronous>, transform_indices = @transform_5, window_bounds = array<i64: 1, 128>}, {pipeline_mode = #tpu.pipeline_mode<synchronous>, transform_indices = @transform_6, window_bounds = array<i64: 1, 128>}, {transform_indices = @transform_7, window_bounds = array<i64: 8, 128>}]} {
    %c0 = arith.constant 0 : index
    %c0_0 = arith.constant 0 : index
    %0 = vector.load %arg1[%c0, %c0_0] : memref<8x128xf32, #tpu.memory_space<vmem>>, vector<8x128xf32>
    %1 = arith.truncf %0 : vector<8x128xf32> to vector<8x128xbf16>
    %c0_1 = arith.constant 0 : index
    %c0_2 = arith.constant 0 : index
    %2 = vector.load %arg2[%c0_1, %c0_2] : memref<128x128xbf16, #tpu.memory_space<vmem>>, vector<128x128xbf16>
    %cst = arith.constant dense<0.000000e+00> : vector<8x128xf32>
    %3 = tpu.matmul %1, %2, %cst {dimension_numbers = #tpu.dot_dimension_numbers<[1], [0], [0], [1], [0, 0, 1, 1], [], []>} : vector<8x128xbf16>, vector<128x128xbf16>, vector<8x128xf32> -> vector<8x128xf32>
    %c0_3 = arith.constant 0 : index
    %c0_4 = arith.constant 0 : index
    %4 = vector.load %arg3[%c0_3, %c0_4] : memref<1x128xf32, #tpu.memory_space<vmem>>, vector<1x128xf32>
    %5 = vector.broadcast %4 : vector<1x128xf32> to vector<8x128xf32>
    %6 = arith.addf %3, %5 : vector<8x128xf32>
    %cst_5 = arith.constant 0.000000e+00 : f32
    %7 = vector.broadcast %cst_5 : f32 to vector<8x128xf32>
    %8 = arith.maximumf %6, %7 : vector<8x128xf32>
    %9 = arith.truncf %8 : vector<8x128xf32> to vector<8x128xbf16>
    %c0_6 = arith.constant 0 : index
    %c0_7 = arith.constant 0 : index
    %10 = vector.load %arg4[%c0_6, %c0_7] : memref<128x128xbf16, #tpu.memory_space<vmem>>, vector<128x128xbf16>
    %cst_8 = arith.constant dense<0.000000e+00> : vector<8x128xf32>
    %11 = tpu.matmul %9, %10, %cst_8 {dimension_numbers = #tpu.dot_dimension_numbers<[1], [0], [0], [1], [0, 0, 1, 1], [], []>} : vector<8x128xbf16>, vector<128x128xbf16>, vector<8x128xf32> -> vector<8x128xf32>
    %c0_9 = arith.constant 0 : index
    %c0_10 = arith.constant 0 : index
    %12 = vector.load %arg5[%c0_9, %c0_10] : memref<1x128xf32, #tpu.memory_space<vmem>>, vector<1x128xf32>
    %13 = vector.broadcast %12 : vector<1x128xf32> to vector<8x128xf32>
    %14 = arith.addf %11, %13 : vector<8x128xf32>
    %15 = arith.addf %14, %0 : vector<8x128xf32>
    %c0_11 = arith.constant 0 : index
    %c0_12 = arith.constant 0 : index
    %16 = vector.load %arg6[%c0_11, %c0_12] : memref<1x128xf32, #tpu.memory_space<vmem>>, vector<1x128xf32>
    %c0_13 = arith.constant 0 : index
    %c0_14 = arith.constant 0 : index
    %17 = vector.load %arg7[%c0_13, %c0_14] : memref<1x128xf32, #tpu.memory_space<vmem>>, vector<1x128xf32>
    %cst_15 = arith.constant dense<0.000000e+00> : vector<8xf32>
    %18 = vector.multi_reduction <add>, %15, %cst_15 [1] : vector<8x128xf32> to vector<8xf32>
    %19 = vector.shape_cast %18 : vector<8xf32> to vector<8x1xf32>
    %cst_16 = arith.constant 3.125000e-02 : f32
    %20 = vector.broadcast %cst_16 : f32 to vector<8x1xf32>
    %21 = arith.mulf %19, %20 : vector<8x1xf32>
    %22 = vector.broadcast %21 : vector<8x1xf32> to vector<8x128xf32>
    %23 = arith.subf %15, %22 : vector<8x128xf32>
    %24 = tpu.iota {dimensions = array<i32: 1>} : vector<8x128xi32>
    %c32_i32 = arith.constant 32 : i32
    %25 = vector.broadcast %c32_i32 : i32 to vector<8x128xi32>
    %26 = arith.cmpi slt, %24, %25 : vector<8x128xi32>
    %cst_17 = arith.constant 0.000000e+00 : f32
    %27 = vector.broadcast %cst_17 : f32 to vector<8x128xf32>
    %28 = arith.select %26, %23, %27 : vector<8x128xi1>, vector<8x128xf32>
    %29 = arith.mulf %28, %28 : vector<8x128xf32>
    %cst_18 = arith.constant dense<0.000000e+00> : vector<8xf32>
    %30 = vector.multi_reduction <add>, %29, %cst_18 [1] : vector<8x128xf32> to vector<8xf32>
    %31 = vector.shape_cast %30 : vector<8xf32> to vector<8x1xf32>
    %cst_19 = arith.constant 3.125000e-02 : f32
    %32 = vector.broadcast %cst_19 : f32 to vector<8x1xf32>
    %33 = arith.mulf %31, %32 : vector<8x1xf32>
    %cst_20 = arith.constant 9.99999974E-6 : f32
    %34 = vector.broadcast %cst_20 : f32 to vector<8x1xf32>
    %35 = arith.addf %33, %34 : vector<8x1xf32>
    %36 = math.rsqrt %35 : vector<8x1xf32>
    %37 = vector.broadcast %36 : vector<8x1xf32> to vector<8x128xf32>
    %38 = vector.broadcast %16 : vector<1x128xf32> to vector<8x128xf32>
    %39 = arith.mulf %37, %38 : vector<8x128xf32>
    %40 = arith.mulf %28, %39 : vector<8x128xf32>
    %41 = vector.broadcast %17 : vector<1x128xf32> to vector<8x128xf32>
    %42 = arith.addf %40, %41 : vector<8x128xf32>
    %c0_21 = arith.constant 0 : index
    %c0_22 = arith.constant 0 : index
    %43 = vector.load %arg8[%c0_21, %c0_22] : memref<8x128xf32, #tpu.memory_space<vmem>>, vector<8x128xf32>
    tpu.vector_store %arg8[%c0_21, %c0_22], %42 {strides = array<i32>} : memref<8x128xf32, #tpu.memory_space<vmem>>, vector<8x128xf32>,
    return
  }
  func.func @transform_0(%arg0: i32) -> (i32, i32) {
    %c0_i32 = arith.constant 0 : i32
    %c0_i32_0 = arith.constant 0 : i32
    return %arg0, %c0_i32 : i32, i32
  }
  func.func @transform_1(%arg0: i32) -> (i32, i32) {
    %c0_i32 = arith.constant 0 : i32
    %c0_i32_0 = arith.constant 0 : i32
    %c0_i32_1 = arith.constant 0 : i32
    return %c0_i32, %c0_i32_0 : i32, i32
  }
  func.func @transform_2(%arg0: i32) -> (i32, i32) {
    %c0_i32 = arith.constant 0 : i32
    %c0_i32_0 = arith.constant 0 : i32
    %c0_i32_1 = arith.constant 0 : i32
    return %c0_i32, %c0_i32_0 : i32, i32
  }
  func.func @transform_3(%arg0: i32) -> (i32, i32) {
    %c0_i32 = arith.constant 0 : i32
    %c0_i32_0 = arith.constant 0 : i32
    %c0_i32_1 = arith.constant 0 : i32
    return %c0_i32, %c0_i32_0 : i32, i32
  }
  func.func @transform_4(%arg0: i32) -> (i32, i32) {
    %c0_i32 = arith.constant 0 : i32
    %c0_i32_0 = arith.constant 0 : i32
    %c0_i32_1 = arith.constant 0 : i32
    return %c0_i32, %c0_i32_0 : i32, i32
  }
  func.func @transform_5(%arg0: i32) -> (i32, i32) {
    %c0_i32 = arith.constant 0 : i32
    %c0_i32_0 = arith.constant 0 : i32
    %c0_i32_1 = arith.constant 0 : i32
    return %c0_i32, %c0_i32_0 : i32, i32
  }
  func.func @transform_6(%arg0: i32) -> (i32, i32) {
    %c0_i32 = arith.constant 0 : i32
    %c0_i32_0 = arith.constant 0 : i32
    %c0_i32_1 = arith.constant 0 : i32
    return %c0_i32, %c0_i32_0 : i32, i32
  }
  func.func @transform_7(%arg0: i32) -> (i32, i32) {
    %c0_i32 = arith.constant 0 : i32
    %c0_i32_0 = arith.constant 0 : i32
    return %arg0, %c0_i32 : i32, i32
  }
}

module attributes {stable_mosaic.version = 11 : i64} {
  func.func @_san_resident_kernel(%arg0: i32, %arg1: memref<8x128xf32, #tpu.memory_space<vmem>>, %arg2: memref<128x128xbf16, #tpu.memory_space<vmem>>, %arg3: memref<1x128xf32, #tpu.memory_space<vmem>>, %arg4: memref<128x128xbf16, #tpu.memory_space<vmem>>, %arg5: memref<1x128xf32, #tpu.memory_space<vmem>>, %arg6: memref<1x128xf32, #tpu.memory_space<vmem>>, %arg7: memref<1x128xf32, #tpu.memory_space<vmem>>, %arg8: memref<8x128xf32, #tpu.memory_space<vmem>>) attributes {dimension_semantics = [#tpu.dimension_semantics<parallel>], iteration_bounds = array<i64: 2>, scalar_prefetch = 0 : i64, scratch_operands = 0 : i64, tpu.core_type = #tpu.core_type<tc>, window_params = [{transform_indices = @transform_0, window_bounds = array<i64: 8, 128>}, {pipeline_mode = #tpu.pipeline_mode<synchronous>, transform_indices = @transform_1, window_bounds = array<i64: 128, 128>}, {pipeline_mode = #tpu.pipeline_mode<synchronous>, transform_indices = @transform_2, window_bounds = array<i64: 1, 128>}, {pipeline_mode = #tpu.pipeline_mode<synchronous>, transform_indices = @transform_3, window_bounds = array<i64: 128, 128>}, {pipeline_mode = #tpu.pipeline_mode<synchronous>, transform_indices = @transform_4, window_bounds = array<i64: 1, 128>}, {pipeline_mode = #tpu.pipeline_mode<synchronous>, transform_indices = @transform_5, window_bounds = array<i64: 1, 128>}, {pipeline_mode = #tpu.pipeline_mode<synchronous>, transform_indices = @transform_6, window_bounds = array<i64: 1, 128>}, {transform_indices = @transform_7, window_bounds = array<i64: 8, 128>}]} {
    %c0 = arith.constant 0 : index
    %c0_0 = arith.constant 0 : index
    %0 = vector.load %arg1[%c0, %c0_0] : memref<8x128xf32, #tpu.memory_space<vmem>>, vector<8x128xf32>
    %1 = arith.truncf %0 : vector<8x128xf32> to vector<8x128xbf16>
    %c0_1 = arith.constant 0 : index
    %c0_2 = arith.constant 0 : index
    %2 = vector.load %arg2[%c0_1, %c0_2] : memref<128x128xbf16, #tpu.memory_space<vmem>>, vector<128x128xbf16>
    %cst = arith.constant dense<0.000000e+00> : vector<8x128xf32>
    %3 = tpu.matmul %1, %2, %cst {dimension_numbers = #tpu.dot_dimension_numbers<[1], [0], [0], [1], [0, 0, 1, 1], [], []>} : vector<8x128xbf16>, vector<128x128xbf16>, vector<8x128xf32> -> vector<8x128xf32>
    %c0_3 = arith.constant 0 : index
    %c0_4 = arith.constant 0 : index
    %4 = vector.load %arg3[%c0_3, %c0_4] : memref<1x128xf32, #tpu.memory_space<vmem>>, vector<1x128xf32>
    %5 = vector.broadcast %4 : vector<1x128xf32> to vector<8x128xf32>
    %6 = arith.addf %3, %5 : vector<8x128xf32>
    %cst_5 = arith.constant 0.000000e+00 : f32
    %7 = vector.broadcast %cst_5 : f32 to vector<8x128xf32>
    %8 = arith.maximumf %6, %7 : vector<8x128xf32>
    %9 = arith.truncf %8 : vector<8x128xf32> to vector<8x128xbf16>
    %c0_6 = arith.constant 0 : index
    %c0_7 = arith.constant 0 : index
    %10 = vector.load %arg4[%c0_6, %c0_7] : memref<128x128xbf16, #tpu.memory_space<vmem>>, vector<128x128xbf16>
    %cst_8 = arith.constant dense<0.000000e+00> : vector<8x128xf32>
    %11 = tpu.matmul %9, %10, %cst_8 {dimension_numbers = #tpu.dot_dimension_numbers<[1], [0], [0], [1], [0, 0, 1, 1], [], []>} : vector<8x128xbf16>, vector<128x128xbf16>, vector<8x128xf32> -> vector<8x128xf32>
    %c0_9 = arith.constant 0 : index
    %c0_10 = arith.constant 0 : index
    %12 = vector.load %arg5[%c0_9, %c0_10] : memref<1x128xf32, #tpu.memory_space<vmem>>, vector<1x128xf32>
    %13 = vector.broadcast %12 : vector<1x128xf32> to vector<8x128xf32>
    %14 = arith.addf %11, %13 : vector<8x128xf32>
    %15 = arith.addf %14, %0 : vector<8x128xf32>
    %c0_11 = arith.constant 0 : index
    %c0_12 = arith.constant 0 : index
    %16 = vector.load %arg6[%c0_11, %c0_12] : memref<1x128xf32, #tpu.memory_space<vmem>>, vector<1x128xf32>
    %c0_13 = arith.constant 0 : index
    %c0_14 = arith.constant 0 : index
    %17 = vector.load %arg7[%c0_13, %c0_14] : memref<1x128xf32, #tpu.memory_space<vmem>>, vector<1x128xf32>
    %cst_15 = arith.constant dense<0.000000e+00> : vector<8xf32>
    %18 = vector.multi_reduction <add>, %15, %cst_15 [1] : vector<8x128xf32> to vector<8xf32>
    %19 = vector.shape_cast %18 : vector<8xf32> to vector<8x1xf32>
    %cst_16 = arith.constant 3.125000e-02 : f32
    %20 = vector.broadcast %cst_16 : f32 to vector<8x1xf32>
    %21 = arith.mulf %19, %20 : vector<8x1xf32>
    %22 = vector.broadcast %21 : vector<8x1xf32> to vector<8x128xf32>
    %23 = arith.subf %15, %22 : vector<8x128xf32>
    %24 = tpu.iota {dimensions = array<i32: 1>} : vector<8x128xi32>
    %c32_i32 = arith.constant 32 : i32
    %25 = vector.broadcast %c32_i32 : i32 to vector<8x128xi32>
    %26 = arith.cmpi slt, %24, %25 : vector<8x128xi32>
    %cst_17 = arith.constant 0.000000e+00 : f32
    %27 = vector.broadcast %cst_17 : f32 to vector<8x128xf32>
    %28 = arith.select %26, %23, %27 : vector<8x128xi1>, vector<8x128xf32>
    %29 = arith.mulf %28, %28 : vector<8x128xf32>
    %cst_18 = arith.constant dense<0.000000e+00> : vector<8xf32>
    %30 = vector.multi_reduction <add>, %29, %cst_18 [1] : vector<8x128xf32> to vector<8xf32>
    %31 = vector.shape_cast %30 : vector<8xf32> to vector<8x1xf32>
    %cst_19 = arith.constant 3.125000e-02 : f32
    %32 = vector.broadcast %cst_19 : f32 to vector<8x1xf32>
    %33 = arith.mulf %31, %32 : vector<8x1xf32>
    %cst_20 = arith.constant 9.99999974E-6 : f32
    %34 = vector.broadcast %cst_20 : f32 to vector<8x1xf32>
    %35 = arith.addf %33, %34 : vector<8x1xf32>
    %36 = math.rsqrt %35 : vector<8x1xf32>
    %37 = vector.broadcast %36 : vector<8x1xf32> to vector<8x128xf32>
    %38 = vector.broadcast %16 : vector<1x128xf32> to vector<8x128xf32>
    %39 = arith.mulf %37, %38 : vector<8x128xf32>
    %40 = arith.mulf %28, %39 : vector<8x128xf32>
    %41 = vector.broadcast %17 : vector<1x128xf32> to vector<8x128xf32>
    %42 = arith.addf %40, %41 : vector<8x128xf32>
    %c0_21 = arith.constant 0 : index
    %c0_22 = arith.constant 0 : index
    %43 = vector.load %arg8[%c0_21, %c0_22] : memref<8x128xf32, #tpu.memory_space<vmem>>, vector<8x128xf32>
    tpu.vector_store %arg8[%c0_21, %c0_22], %42 {strides = array<i32>} : memref<8x128xf32, #tpu.memory_space<vmem>>, vector<8x128xf32>,
    return
  }
  func.func @transform_0(%arg0: i32) -> (i32, i32) {
    %c0_i32 = arith.constant 0 : i32
    %c0_i32_0 = arith.constant 0 : i32
    return %arg0, %c0_i32 : i32, i32
  }
  func.func @transform_1(%arg0: i32) -> (i32, i32) {
    %c0_i32 = arith.constant 0 : i32
    %c0_i32_0 = arith.constant 0 : i32
    %c0_i32_1 = arith.constant 0 : i32
    return %c0_i32, %c0_i32_0 : i32, i32
  }
  func.func @transform_2(%arg0: i32) -> (i32, i32) {
    %c0_i32 = arith.constant 0 : i32
    %c0_i32_0 = arith.constant 0 : i32
    %c0_i32_1 = arith.constant 0 : i32
    return %c0_i32, %c0_i32_0 : i32, i32
  }
  func.func @transform_3(%arg0: i32) -> (i32, i32) {
    %c0_i32 = arith.constant 0 : i32
    %c0_i32_0 = arith.constant 0 : i32
    %c0_i32_1 = arith.constant 0 : i32
    return %c0_i32, %c0_i32_0 : i32, i32
  }
  func.func @transform_4(%arg0: i32) -> (i32, i32) {
    %c0_i32 = arith.constant 0 : i32
    %c0_i32_0 = arith.constant 0 : i32
    %c0_i32_1 = arith.constant 0 : i32
    return %c0_i32, %c0_i32_0 : i32, i32
  }
  func.func @transform_5(%arg0: i32) -> (i32, i32) {
    %c0_i32 = arith.constant 0 : i32
    %c0_i32_0 = arith.constant 0 : i32
    %c0_i32_1 = arith.constant 0 : i32
    return %c0_i32, %c0_i32_0 : i32, i32
  }
  func.func @transform_6(%arg0: i32) -> (i32, i32) {
    %c0_i32 = arith.constant 0 : i32
    %c0_i32_0 = arith.constant 0 : i32
    %c0_i32_1 = arith.constant 0 : i32
    return %c0_i32, %c0_i32_0 : i32, i32
  }
  func.func @transform_7(%arg0: i32) -> (i32, i32) {
    %c0_i32 = arith.constant 0 : i32
    %c0_i32_0 = arith.constant 0 : i32
    return %arg0, %c0_i32 : i32, i32
  }
}

</mosaic_0001>

<llo_original>
// kernel: tpu_custom_call.1
$region0: #{tpu_custom_call.1}
  #allocation0 [shape = 'u32[]', space=smem, size = 0x4, offset = 0x4, fixed_abs, tag = 'smem constant byte address 0x4 - core index']
  #allocation1 [shape = 'u32[72,128]{1,0:T(1,128)}', space=vmem, size = 0x9000, scoped, tag = 'internal scratch']
  %s0 = inlined_call_operand.hbm [shape: f32[16,128], index: 0, kind: input, shape index: {}]
  %s1 = inlined_call_operand.hbm [shape: bf16[128,128], index: 1, kind: input, shape index: {}]
  %s2 = inlined_call_operand.vmem [shape: f32[1,128], index: 2, kind: input, shape index: {}]
  %s3 = inlined_call_operand.hbm [shape: bf16[128,128], index: 3, kind: input, shape index: {}]
  %s4 = inlined_call_operand.vmem [shape: f32[1,128], index: 4, kind: input, shape index: {}]
  %s5 = inlined_call_operand.vmem [shape: f32[1,128], index: 5, kind: input, shape index: {}]
  %s6 = inlined_call_operand.vmem [shape: f32[1,128], index: 6, kind: input, shape index: {}]
  %s7 = inlined_call_operand.hbm [shape: f32[16,128], index: 7, kind: output, shape index: {}]
  %s8 = sld [smem:[#allocation0]]
  $region73: #{tpu_custom_call.1} parent=0
    _
  %s10 = ssub.s32 1, %s8
  %s11 = scalar_select 0, %s10, %s8
  $region1: #{tpu_custom_call.1} parent=0
    #allocation2 [shape = 'u8[8192]{0}', space=vmem, size = 0x2000, scoped, tag = 'input window, operand 0']
    #allocation3 [shape = 's32[2]{0}', space=sflag, size = 0x8, scoped, tag = 'scoped memory for tpu_custom_call.1']
    #allocation4 [shape = 's32[2]{0}', space=sflag, size = 0x8, scoped, tag = 'scoped memory for tpu_custom_call.1']
    #allocation5 [shape = 'u8[32768]{0}', space=vmem, size = 0x8000, scoped, tag = 'input window, operand 1, single buffered']
    #allocation6 [shape = 's32[1]{0}', space=sflag, size = 0x4, scoped, tag = 'scoped memory for tpu_custom_call.1']
    #allocation7 [shape = 'u8[32768]{0}', space=vmem, size = 0x8000, scoped, tag = 'input window, operand 3, single buffered']
    #allocation8 [shape = 'u8[8192]{0}', space=vmem, size = 0x2000, scoped, tag = 'output window, operand 0']
    %12 = vsyncpa [#allocation3], 0
    %s13 = scalar_lea.sflag [#allocation3], 1
    %14 = vsyncpa %s13, 0
    %15 = vsyncpa [#allocation6], 0
    %16 = vsyncpa [#allocation4], 0
    %s17 = scalar_lea.sflag [#allocation4], 1
    %18 = vsyncpa %s17, 0
    loop: start=0, step=1, limit=4
    $region2: #{tpu_custom_call.1} parent=1 // loop_pre_header
      _
    $region3: #{tpu_custom_call.1} parent=1 // loop_header
      %s20 = sphi 0, %s24
      %p21 = scmp.ge.s32.totalorder %s20, 4
      %s30 = sphi 0, %s32
      %s33 = sphi 0, %s30
      %s34 = sphi 0, %s33
      %s50 = sphi 0, %s34
      %s54 = sphi 0, %s54
      %s56 = sphi 0, %s54
      %s57 = sphi 0, %s56
      %s71 = sphi 0, %s57
      %s75 = sphi 0, %s75
      %s77 = sphi 0, %s75
      %s78 = sphi 0, %s77
      %s92 = sphi 0, %s78
      %s96 = sphi 0, %s96
      %s98 = sphi 0, %s96
      %s99 = sphi 0, %s98
      %s113 = sphi 0, %s99
      %s117 = sphi 0, %s117
      %s119 = sphi 0, %s117
      %s120 = sphi 0, %s119
      %s134 = sphi 0, %s120
      %s138 = sphi 0, %s138
      %s140 = sphi 0, %s138
      %s141 = sphi 0, %s140
      %s155 = sphi 0, %s141
      %s159 = sphi 0, %s159
      %s161 = sphi 0, %s159
      %s162 = sphi 0, %s161
      %s176 = sphi 0, %s162
      %s182 = sphi 0, %s184
      %s185 = sphi 0, %s182
      %s186 = sphi 0, %s185
      %s202 = sphi 0, %s186
    $region4: #{tpu_custom_call.1} parent=1 // loop_header_branch
      %23 = sbr.rel (%p21) target = $region8
    $region5: #{tpu_custom_call.1} parent=1 // loop_body
      %s25 = ssub.s32 %s20, 1
      %s26 = ssub.s32 %s20, 2
      %s27 = sadd.s32 %s20, 1
      %s28 = ssub.s32 %s20, %s27
      %p29 = scmp.eq.s32.totalorder %s28, 0
      %s31 = sadd.s32 %s30, 1
      %s32 = scalar_select %p29, %s30, %s31
      %p35 = pneg %p29
      %p36 = scmp.eq.s32.totalorder %s20, 1
      %p37 = por %p35, %p36
      %p38 = scmp.ne.s32.totalorder %s30, %s33
      %p39 = scmp.eq.s32.totalorder %s20, 0
      %p40 = por %p38, %p39
      %p41 = scmp.ne.s32.totalorder %s30, %s33
      %p42 = scmp.eq.s32.totalorder %s25, 1
      %p43 = por %p41, %p42
      %p44 = scmp.ne.s32.totalorder %s33, %s34
      %p45 = scmp.eq.s32.totalorder %s25, 0
      %p46 = por %p44, %p45
      %p47 = scmp.ne.s32.totalorder %s33, %s34
      %p48 = scmp.eq.s32.totalorder %s26, 1
      %p49 = por %p47, %p48
      %p51 = scmp.ne.s32.totalorder %s34, %s50
      %p52 = scmp.eq.s32.totalorder %s26, 0
      %p53 = por %p51, %p52
      %s55 = sadd.s32 %s54, 1
      %p58 = scmp.eq.s32.totalorder %s20, 1
      %p59 = scmp.ne.s32.totalorder %s54, %s56
      %p60 = scmp.eq.s32.totalorder %s20, 0
      %p61 = por %p59, %p60
      %p62 = scmp.ne.s32.totalorder %s54, %s56
      %p63 = scmp.eq.s32.totalorder %s25, 1
      %p64 = por %p62, %p63
      %p65 = scmp.ne.s32.totalorder %s56, %s57
      %p66 = scmp.eq.s32.totalorder %s25, 0
      %p67 = por %p65, %p66
      %p68 = scmp.ne.s32.totalorder %s56, %s57
      %p69 = scmp.eq.s32.totalorder %s26, 1
      %p70 = por %p68, %p69
      %p72 = scmp.ne.s32.totalorder %s57, %s71
      %p73 = scmp.eq.s32.totalorder %s26, 0
      %p74 = por %p72, %p73
      %s76 = sadd.s32 %s75, 1
      %p79 = scmp.eq.s32.totalorder %s20, 1
      %p80 = scmp.ne.s32.totalorder %s75, %s77
      %p81 = scmp.eq.s32.totalorder %s20, 0
      %p82 = por %p80, %p81
      %p83 = scmp.ne.s32.totalorder %s75, %s77
      %p84 = scmp.eq.s32.totalorder %s25, 1
      %p85 = por %p83, %p84
      %p86 = scmp.ne.s32.totalorder %s77, %s78
      %p87 = scmp.eq.s32.totalorder %s25, 0
      %p88 = por %p86, %p87
      %p89 = scmp.ne.s32.totalorder %s77, %s78
      %p90 = scmp.eq.s32.totalorder %s26, 1
      %p91 = por %p89, %p90
      %p93 = scmp.ne.s32.totalorder %s78, %s92
      %p94 = scmp.eq.s32.totalorder %s26, 0
      %p95 = por %p93, %p94
      %s97 = sadd.s32 %s96, 1
      %p100 = scmp.eq.s32.totalorder %s20, 1
      %p101 = scmp.ne.s32.totalorder %s96, %s98
      %p102 = scmp.eq.s32.totalorder %s20, 0
      %p103 = por %p101, %p102
      %p104 = scmp.ne.s32.totalorder %s96, %s98
      %p105 = scmp.eq.s32.totalorder %s25, 1
      %p106 = por %p104, %p105
      %p107 = scmp.ne.s32.totalorder %s98, %s99
      %p108 = scmp.eq.s32.totalorder %s25, 0
      %p109 = por %p107, %p108
      %p110 = scmp.ne.s32.totalorder %s98, %s99
      %p111 = scmp.eq.s32.totalorder %s26, 1
      %p112 = por %p110, %p111
      %p114 = scmp.ne.s32.totalorder %s99, %s113
      %p115 = scmp.eq.s32.totalorder %s26, 0
      %p116 = por %p114, %p115
      %s118 = sadd.s32 %s117, 1
      %p121 = scmp.eq.s32.totalorder %s20, 1
      %p122 = scmp.ne.s32.totalorder %s117, %s119
      %p123 = scmp.eq.s32.totalorder %s20, 0
      %p124 = por %p122, %p123
      %p125 = scmp.ne.s32.totalorder %s117, %s119
      %p126 = scmp.eq.s32.totalorder %s25, 1
      %p127 = por %p125, %p126
      %p128 = scmp.ne.s32.totalorder %s119, %s120
      %p129 = scmp.eq.s32.totalorder %s25, 0
      %p130 = por %p128, %p129
      %p131 = scmp.ne.s32.totalorder %s119, %s120
      %p132 = scmp.eq.s32.totalorder %s26, 1
      %p133 = por %p131, %p132
      %p135 = scmp.ne.s32.totalorder %s120, %s134
      %p136 = scmp.eq.s32.totalorder %s26, 0
      %p137 = por %p135, %p136
      %s139 = sadd.s32 %s138, 1
      %p142 = scmp.eq.s32.totalorder %s20, 1
      %p143 = scmp.ne.s32.totalorder %s138, %s140
      %p144 = scmp.eq.s32.totalorder %s20, 0
      %p145 = por %p143, %p144
      %p146 = scmp.ne.s32.totalorder %s138, %s140
      %p147 = scmp.eq.s32.totalorder %s25, 1
      %p148 = por %p146, %p147
      %p149 = scmp.ne.s32.totalorder %s140, %s141
      %p150 = scmp.eq.s32.totalorder %s25, 0
      %p151 = por %p149, %p150
      %p152 = scmp.ne.s32.totalorder %s140, %s141
      %p153 = scmp.eq.s32.totalorder %s26, 1
      %p154 = por %p152, %p153
      %p156 = scmp.ne.s32.totalorder %s141, %s155
      %p157 = scmp.eq.s32.totalorder %s26, 0
      %p158 = por %p156, %p157
      %s160 = sadd.s32 %s159, 1
      %p163 = scmp.eq.s32.totalorder %s20, 1
      %p164 = scmp.ne.s32.totalorder %s159, %s161
      %p165 = scmp.eq.s32.totalorder %s20, 0
      %p166 = por %p164, %p165
      %p167 = scmp.ne.s32.totalorder %s159, %s161
      %p168 = scmp.eq.s32.totalorder %s25, 1
      %p169 = por %p167, %p168
      %p170 = scmp.ne.s32.totalorder %s161, %s162
      %p171 = scmp.eq.s32.totalorder %s25, 0
      %p172 = por %p170, %p171
      %p173 = scmp.ne.s32.totalorder %s161, %s162
      %p174 = scmp.eq.s32.totalorder %s26, 1
      %p175 = por %p173, %p174
      %p177 = scmp.ne.s32.totalorder %s162, %s176
      %p178 = scmp.eq.s32.totalorder %s26, 0
      %p179 = por %p177, %p178
      %s180 = ssub.s32 %s20, %s27
      %p181 = scmp.eq.s32.totalorder %s180, 0
      %s183 = sadd.s32 %s182, 1
      %s184 = scalar_select %p181, %s182, %s183
      %p187 = pneg %p181
      %p188 = scmp.eq.s32.totalorder %s20, 1
      %p189 = por %p187, %p188
      %p190 = scmp.ne.s32.totalorder %s182, %s185
      %p191 = scmp.eq.s32.totalorder %s20, 0
      %p192 = por %p190, %p191
      %p193 = scmp.ne.s32.totalorder %s182, %s185
      %p194 = scmp.eq.s32.totalorder %s25, 1
      %p195 = por %p193, %p194
      %p196 = scmp.ne.s32.totalorder %s185, %s186
      %p197 = scmp.eq.s32.totalorder %s25, 0
      %p198 = por %p196, %p197
      %p199 = scmp.ne.s32.totalorder %s185, %s186
      %p200 = scmp.eq.s32.totalorder %s26, 1
      %p201 = por %p199, %p200
      %p203 = scmp.ne.s32.totalorder %s186, %s202
      %p204 = scmp.eq.s32.totalorder %s26, 0
      %p205 = por %p203, %p204
      %p206 = scmp.le.s32.totalorder 1, %s20
      %p207 = scmp.lt.s32.totalorder %s20, 3
      %p208 = pnand %p206, %p207
      %p209 = pneg %p208
      // Predicated region
      $region9: #{tpu_custom_call.1} parent=5 // pred_check
        _
      $region10: #{tpu_custom_call.1} parent=5 // pred_check_branch
        %211 = sbr.rel (%p208) target = $region12
      $region11: #{tpu_custom_call.1} parent=5 // pred_region
        %s212 = ssub.s32 %s20, 1
        // Predicated region
        $region13: #{tpu_custom_call.1} parent=11 // pred_check
          %p213 = pneg %p67
        $region14: #{tpu_custom_call.1} parent=11 // pred_check_branch
          %215 = sbr.rel (%p213) target = $region16
        $region15: #{tpu_custom_call.1} parent=11 // pred_region
          %217 = vsyncadd [#allocation6], 0
          %s218 = sshll.u32 %s1, 4
          %s219 = int_to_ptr.hbm [resolvable:$true] %s218
          %s220 = sshll.u32 [#allocation5], 4
          %s221 = int_to_ptr.vmem [resolvable:$true] %s220
          %226 = dma.hbm_to_vmem [thread:$0]  %s219, 1024, %s221, [#allocation6], 64, 64, 4
        $region16: #{tpu_custom_call.1} parent=11 // pred_fallthru
          _
        // Predicated region
        $region17: #{tpu_custom_call.1} parent=11 // pred_check
          %p227 = pneg %p88
        $region18: #{tpu_custom_call.1} parent=11 // pred_check_branch
          %229 = sbr.rel (%p227) target = $region20
        $region19: #{tpu_custom_call.1} parent=11 // pred_region
          _
        $region20: #{tpu_custom_call.1} parent=11 // pred_fallthru
          _
        // Predicated region
        $region21: #{tpu_custom_call.1} parent=11 // pred_check
          %p230 = pneg %p109
        $region22: #{tpu_custom_call.1} parent=11 // pred_check_branch
          %232 = sbr.rel (%p230) target = $region24
        $region23: #{tpu_custom_call.1} parent=11 // pred_region
          %234 = vsyncadd [#allocation6], 0
          %s235 = sshll.u32 %s3, 4
          %s236 = int_to_ptr.hbm [resolvable:$true] %s235
          %s237 = sshll.u32 [#allocation7], 4
          %s238 = int_to_ptr.vmem [resolvable:$true] %s237
          %243 = dma.hbm_to_vmem [thread:$0]  %s236, 1024, %s238, [#allocation6], 64, 64, 4
        $region24: #{tpu_custom_call.1} parent=11 // pred_fallthru
          _
        // Predicated region
        $region25: #{tpu_custom_call.1} parent=11 // pred_check
          %p244 = pneg %p130
        $region26: #{tpu_custom_call.1} parent=11 // pred_check_branch
          %246 = sbr.rel (%p244) target = $region28
        $region27: #{tpu_custom_call.1} parent=11 // pred_region
          _
        $region28: #{tpu_custom_call.1} parent=11 // pred_fallthru
          _
        // Predicated region
        $region29: #{tpu_custom_call.1} parent=11 // pred_check
          %p247 = pneg %p151
        $region30: #{tpu_custom_call.1} parent=11 // pred_check_branch
          %249 = sbr.rel (%p247) target = $region32
        $region31: #{tpu_custom_call.1} parent=11 // pred_region
          _
        $region32: #{tpu_custom_call.1} parent=11 // pred_fallthru
          _
        // Predicated region
        $region33: #{tpu_custom_call.1} parent=11 // pred_check
          %p250 = pneg %p172
        $region34: #{tpu_custom_call.1} parent=11 // pred_check_branch
          %252 = sbr.rel (%p250) target = $region36
        $region35: #{tpu_custom_call.1} parent=11 // pred_region
          _
        $region36: #{tpu_custom_call.1} parent=11 // pred_fallthru
          _
      $region12: #{tpu_custom_call.1} parent=5 // pred_fallthru
        _
      %p253 = scmp.lt.s32.totalorder %s20, 2
      // Predicated region
      $region37: #{tpu_custom_call.1} parent=5 // pred_check
        %p254 = pneg %p253
      $region38: #{tpu_custom_call.1} parent=5 // pred_check_branch
        %256 = sbr.rel (%p254) target = $region40
      $region39: #{tpu_custom_call.1} parent=5 // pred_region
        // Predicated region
        $region41: #{tpu_custom_call.1} parent=39 // pred_check
          %p257 = pneg %p40
        $region42: #{tpu_custom_call.1} parent=39 // pred_check_branch
          %259 = sbr.rel (%p257) target = $region44
        $region43: #{tpu_custom_call.1} parent=39 // pred_region
          %s260 = sand.u32 %s30, 1
          %s261 = scalar_lea.sflag [#allocation3], %s260
          %s262 = sand.u32 %s30, 1
          %s263 = smul.addr %s262, 8
          %s264 = scalar_lea.vmem [#allocation2], %s263
          %266 = vsyncadd %s261, 0
          %s267 = smul.addr %s20, 8
          %s268 = scalar_lea.hbm %s0, %s267
          %s270 = sshll.u32 %s268, 4
          %s271 = int_to_ptr.hbm [resolvable:$true] %s270
          %s272 = sshll.u32 %s264, 4
          %s273 = int_to_ptr.vmem [resolvable:$true] %s272
          %275 = dma.hbm_to_vmem [thread:$0]  %s271, 128, %s273, %s261
        $region44: #{tpu_custom_call.1} parent=39 // pred_fallthru
          _
      $region40: #{tpu_custom_call.1} parent=5 // pred_fallthru
        _
      %p276 = scmp.le.s32.totalorder 1, %s20
      %p277 = scmp.lt.s32.totalorder %s20, 3
      %p278 = pnand %p276, %p277
      %p279 = pneg %p278
      // Predicated region
      $region45: #{tpu_custom_call.1} parent=5 // pred_check
        _
      $region46: #{tpu_custom_call.1} parent=5 // pred_check_branch
        %281 = sbr.rel (%p278) target = $region48
      $region47: #{tpu_custom_call.1} parent=5 // pred_region
        %s282 = ssub.s32 %s20, 1
        %s283 = sand.u32 %s33, 1
        %s284 = scalar_lea.sflag [#allocation3], %s283
        %s285 = sand.u32 %s33, 1
        %s286 = smul.addr %s285, 8
        %s287 = scalar_lea.vmem [#allocation2], %s286
        // Predicated region
        $region49: #{tpu_custom_call.1} parent=47 // pred_check
          %p288 = pneg %p46
        $region50: #{tpu_custom_call.1} parent=47 // pred_check_branch
          %290 = sbr.rel (%p288) target = $region52
        $region51: #{tpu_custom_call.1} parent=47 // pred_region
          %292 = dma.done %s284, 128
        $region52: #{tpu_custom_call.1} parent=47 // pred_fallthru
          _
        // Predicated region
        $region53: #{tpu_custom_call.1} parent=47 // pred_check
          %p293 = pneg %p67
        $region54: #{tpu_custom_call.1} parent=47 // pred_check_branch
          %295 = sbr.rel (%p293) target = $region56
        $region55: #{tpu_custom_call.1} parent=47 // pred_region
          %297 = dma.done [#allocation6], 1024
        $region56: #{tpu_custom_call.1} parent=47 // pred_fallthru
          _
        // Predicated region
        $region57: #{tpu_custom_call.1} parent=47 // pred_check
          %p298 = pneg %p109
        $region58: #{tpu_custom_call.1} parent=47 // pred_check_branch
          %300 = sbr.rel (%p298) target = $region60
        $region59: #{tpu_custom_call.1} parent=47 // pred_region
          %302 = dma.done [#allocation6], 1024
        $region60: #{tpu_custom_call.1} parent=47 // pred_fallthru
          _
        %s303 = sand.u32 %s33, 1
        %s304 = scalar_lea.sflag [#allocation3], %s303
        %s305 = sand.u32 %s33, 1
        %s306 = smul.addr %s305, 8
        %s307 = scalar_lea.vmem [#allocation2], %s306
        %p308 = pneg %p46
        %p309 = pneg %p43
        %p310 = pneg %p67
        %p311 = pneg %p64
        %p312 = pneg %p88
        %p313 = pneg %p85
        %p314 = pneg %p109
        %p315 = pneg %p106
        %p316 = pneg %p130
        %p317 = pneg %p127
        %p318 = pneg %p151
        %p319 = pneg %p148
        %p320 = pneg %p172
        %p321 = pneg %p169
        %p322 = pneg %p198
        %p323 = pneg %p195
        %s324 = sand.u32 %s185, 1
        %s325 = scalar_lea.sflag [#allocation4], %s324
        %s326 = sand.u32 %s185, 1
        %s327 = smul.addr %s326, 8
        %s328 = scalar_lea.vmem [#allocation8], %s327
        %v329 = vld [vmem:[%s287] sm:$0xff]
        %v330 = vpack.c.bf16 %v329, %v329
        %v331 = vld [vmem:[#allocation5] sm:$0xf]
        %v332 = vld [vmem:[#allocation5 + $0x4] sm:$0xf]
        %v333 = vld [vmem:[#allocation5 + $0x8] sm:$0xf]
        %v334 = vld [vmem:[#allocation5 + $0xc] sm:$0xf]
        %v335 = vld [vmem:[#allocation5 + $0x10] sm:$0xf]
        %v336 = vld [vmem:[#allocation5 + $0x14] sm:$0xf]
        %v337 = vld [vmem:[#allocation5 + $0x18] sm:$0xf]
        %v338 = vld [vmem:[#allocation5 + $0x1c] sm:$0xf]
        %v339 = vld [vmem:[#allocation5 + $0x20] sm:$0xf]
        %v340 = vld [vmem:[#allocation5 + $0x24] sm:$0xf]
        %v341 = vld [vmem:[#allocation5 + $0x28] sm:$0xf]
        %v342 = vld [vmem:[#allocation5 + $0x2c] sm:$0xf]
        %v343 = vld [vmem:[#allocation5 + $0x30] sm:$0xf]
        %v344 = vld [vmem:[#allocation5 + $0x34] sm:$0xf]
        %v345 = vld [vmem:[#allocation5 + $0x38] sm:$0xf]
        %v346 = vld [vmem:[#allocation5 + $0x3c] sm:$0xf]
        %v347 = vld [vmem:[%s2] sm:$0x1]
        %v349 = vperm.slane %v347, 0
        %v367 = vunpack.c.l.b16 %v331
        %v368 = vunpack.c.l.b16 %v332
        %v369 = vunpack.c.l.b16 %v333
        %v370 = vunpack.c.l.b16 %v334
        %v371 = vunpack.c.l.b16 %v335
        %v372 = vunpack.c.l.b16 %v336
        %v373 = vunpack.c.l.b16 %v337
        %v374 = vunpack.c.l.b16 %v338
        %v375 = vunpack.c.l.b16 %v339
        %v376 = vunpack.c.l.b16 %v340
        %v377 = vunpack.c.l.b16 %v341
        %v378 = vunpack.c.l.b16 %v342
        %v379 = vunpack.c.l.b16 %v343
        %v380 = vunpack.c.l.b16 %v344
        %v381 = vunpack.c.l.b16 %v345
        %v382 = vunpack.c.l.b16 %v346
        %v383 = vpack.c.b16 %v368, %v367
        %v384 = vpack.c.b16 %v370, %v369
        %v385 = vpack.c.b16 %v372, %v371
        %v386 = vpack.c.b16 %v374, %v373
        %v387 = vpack.c.b16 %v376, %v375
        %v388 = vpack.c.b16 %v378, %v377
        %v389 = vpack.c.b16 %v380, %v379
        %v390 = vpack.c.b16 %v382, %v381
        %399 = vmatpush.bf16.msra.mxu0 %v390
        %400 = vmatpush.bf16.msra.mxu0 %v389
        %401 = vmatpush.bf16.msra.mxu0 %v388
        %402 = vmatpush.bf16.msra.mxu0 %v387
        %403 = vmatpush.bf16.msra.mxu0 %v386
        %404 = vmatpush.bf16.msra.mxu0 %v385
        %405 = vmatpush.bf16.msra.mxu0 %v384
        %406 = vmatpush.bf16.msra.mxu0 %v383
        %407 = vmatmul.bf16.gmra.mxu0 %v330
        %v408 = vpop.f32.mrf.mxu0
        %v409 = vadd.f32 %v349, %v408
        %v410 = vpop.f32.mrf.mxu0
        %411 = vdwg.mxu0
        %v412 = vmax.f32 %v409, 0.0
        %v413 = vpack.c.bf16 %v412, %v412
        %v414 = vld [vmem:[#allocation7] sm:$0xf]
        %v415 = vld [vmem:[#allocation7 + $0x4] sm:$0xf]
        %v416 = vld [vmem:[#allocation7 + $0x8] sm:$0xf]
        %v417 = vld [vmem:[#allocation7 + $0xc] sm:$0xf]
        %v418 = vld [vmem:[#allocation7 + $0x10] sm:$0xf]
        %v419 = vld [vmem:[#allocation7 + $0x14] sm:$0xf]
        %v420 = vld [vmem:[#allocation7 + $0x18] sm:$0xf]
        %v421 = vld [vmem:[#allocation7 + $0x1c] sm:$0xf]
        %v422 = vld [vmem:[#allocation7 + $0x20] sm:$0xf]
        %v423 = vld [vmem:[#allocation7 + $0x24] sm:$0xf]
        %v424 = vld [vmem:[#allocation7 + $0x28] sm:$0xf]
        %v425 = vld [vmem:[#allocation7 + $0x2c] sm:$0xf]
        %v426 = vld [vmem:[#allocation7 + $0x30] sm:$0xf]
        %v427 = vld [vmem:[#allocation7 + $0x34] sm:$0xf]
        %v428 = vld [vmem:[#allocation7 + $0x38] sm:$0xf]
        %v429 = vld [vmem:[#allocation7 + $0x3c] sm:$0xf]
        %v430 = vld [vmem:[%s4] sm:$0x1]
        %v432 = vperm.slane %v430, 0
        %v450 = vunpack.c.l.b16 %v414
        %v451 = vunpack.c.l.b16 %v415
        %v452 = vunpack.c.l.b16 %v416
        %v453 = vunpack.c.l.b16 %v417
        %v454 = vunpack.c.l.b16 %v418
        %v455 = vunpack.c.l.b16 %v419
        %v456 = vunpack.c.l.b16 %v420
        %v457 = vunpack.c.l.b16 %v421
        %v458 = vunpack.c.l.b16 %v422
        %v459 = vunpack.c.l.b16 %v423
        %v460 = vunpack.c.l.b16 %v424
        %v461 = vunpack.c.l.b16 %v425
        %v462 = vunpack.c.l.b16 %v426
        %v463 = vunpack.c.l.b16 %v427
        %v464 = vunpack.c.l.b16 %v428
        %v465 = vunpack.c.l.b16 %v429
        %v466 = vpack.c.b16 %v451, %v450
        %v467 = vpack.c.b16 %v453, %v452
        %v468 = vpack.c.b16 %v455, %v454
        %v469 = vpack.c.b16 %v457, %v456
        %v470 = vpack.c.b16 %v459, %v458
        %v471 = vpack.c.b16 %v461, %v460
        %v472 = vpack.c.b16 %v463, %v462
        %v473 = vpack.c.b16 %v465, %v464
        %482 = vmatpush.bf16.msra.mxu0 %v473
        %483 = vmatpush.bf16.msra.mxu0 %v472
        %484 = vmatpush.bf16.msra.mxu0 %v471
        %485 = vmatpush.bf16.msra.mxu0 %v470
        %486 = vmatpush.bf16.msra.mxu0 %v469
        %487 = vmatpush.bf16.msra.mxu0 %v468
        %488 = vmatpush.bf16.msra.mxu0 %v467
        %489 = vmatpush.bf16.msra.mxu0 %v466
        %490 = vmatmul.bf16.gmra.mxu0 %v413
        %v491 = vpop.f32.mrf.mxu0
        %v492 = vadd.f32 %v432, %v491
        %v493 = vpop.f32.mrf.mxu0
        %494 = vdwg.mxu0
        %v495 = vadd.f32 %v492, %v329
        %v496 = vld [vmem:[%s5] sm:$0x1]
        %v497 = vld [vmem:[%s6] sm:$0x1]
        %498 = vadd.xlane.f32.xlu0 %v495
        %v499 = vpop.xlane.xlu0 %498
        %v500 = vmul.f32 %v499, 0.03125
        %v501 = vsub.f32 %v495, %v500
        %v502 = vlaneseq
        %v503 = vand.u32 %v502, 127
        %vm504 = vcmp.lt.s32.totalorder %v503, 32
        %v505 = vsel %vm504, %v501, 0.0
        %v506 = vmul.f32 %v505, %v505
        %507 = vadd.xlane.f32.xlu0 %v506
        %v508 = vpop.xlane.xlu0 %507
        %v509 = vmul.f32 %v508, 0.03125
        %v510 = vadd.f32 %v509, 1e-05
        %v511 = vrsqrt.pop %v510
        %v512 = vmul.f32 %v511, %v510
        %v513 = vmul.f32 %v512, %v511
        %v514 = vmul.f32 0.5, %v513
        %v515 = vsub.f32 1.5, %v514
        %v516 = vmul.f32 %v511, %v515
        %vm517 = vweird.f32 %v510
        %vm518 = vweird.f32 %v511
        %vm519 = vmor %vm517, %vm518
        %v520 = vsel %vm519, %v511, %v516
        %v522 = vperm.slane %v496, 0
        %v524 = vmul.f32 %v520, %v522
        %v525 = vmul.f32 %v505, %v524
        %v527 = vperm.slane %v497, 0
        %v529 = vadd.f32 %v525, %v527
        %530 = vst [vmem:[%s328] sm:$0xff] %v529
        %s531 = sand.u32 %s185, 1
        %s532 = scalar_lea.sflag [#allocation4], %s531
        %s533 = sand.u32 %s185, 1
        %s534 = smul.addr %s533, 8
        %s535 = scalar_lea.vmem [#allocation8], %s534
        // Predicated region
        $region61: #{tpu_custom_call.1} parent=47 // pred_check
          %p536 = pneg %p195
        $region62: #{tpu_custom_call.1} parent=47 // pred_check_branch
          %538 = sbr.rel (%p536) target = $region64
        $region63: #{tpu_custom_call.1} parent=47 // pred_region
          %540 = vsyncadd %s532, 0
          %s541 = smul.addr %s25, 8
          %s542 = scalar_lea.hbm %s7, %s541
          %s544 = sshll.u32 %s535, 4
          %s545 = int_to_ptr.vmem [resolvable:$true] %s544
          %s546 = sshll.u32 %s542, 4
          %s547 = int_to_ptr.hbm [resolvable:$true] %s546
          %549 = dma.vmem_to_hbm [thread:$0]  %s545, 128, %s547, %s532
        $region64: #{tpu_custom_call.1} parent=47 // pred_fallthru
          _
      $region48: #{tpu_custom_call.1} parent=5 // pred_fallthru
        _
      %p550 = scmp.le.s32.totalorder 2, %s20
      // Predicated region
      $region65: #{tpu_custom_call.1} parent=5 // pred_check
        %p551 = pneg %p550
      $region66: #{tpu_custom_call.1} parent=5 // pred_check_branch
        %553 = sbr.rel (%p551) target = $region68
      $region67: #{tpu_custom_call.1} parent=5 // pred_region
        %s554 = ssub.s32 %s20, 2
        // Predicated region
        $region69: #{tpu_custom_call.1} parent=67 // pred_check
          %p555 = pneg %p201
        $region70: #{tpu_custom_call.1} parent=67 // pred_check_branch
          %557 = sbr.rel (%p555) target = $region72
        $region71: #{tpu_custom_call.1} parent=67 // pred_region
          %s558 = sand.u32 %s186, 1
          %s559 = scalar_lea.sflag [#allocation4], %s558
          %s560 = sand.u32 %s186, 1
          %s561 = smul.addr %s560, 8
          %s562 = scalar_lea.vmem [#allocation8], %s561
          %564 = dma.done %s559, 128
        $region72: #{tpu_custom_call.1} parent=67 // pred_fallthru
          _
      $region68: #{tpu_custom_call.1} parent=5 // pred_fallthru
        _
    $region6: #{tpu_custom_call.1} parent=1 // loop_footer
      %s24 = sadd.s32 1, %s20
    $region7: #{tpu_custom_call.1} parent=1 // loop_footer_branch
      %19 = sbr.rel target = $region3
    $region8: #{tpu_custom_call.1} parent=1 // loop_exit
      _
    %565 = vsyncpa [#allocation3], 1
    %s566 = scalar_lea.sflag [#allocation3], 1
    %567 = vsyncpa %s566, 1
    %568 = vsyncpa [#allocation6], 1
    %569 = vsyncpa [#allocation4], 1
    %s570 = scalar_lea.sflag [#allocation4], 1
    %571 = vsyncpa %s570, 1

// kernel: tpu_custom_call.1
$region0: #{tpu_custom_call.1}
  #allocation0 [shape = 'u32[]', space=smem, size = 0x4, offset = 0x4, fixed_abs, tag = 'smem constant byte address 0x4 - core index']
  #allocation1 [shape = 'u32[72,128]{1,0:T(1,128)}', space=vmem, size = 0x9000, scoped, tag = 'internal scratch']
  %s0 = inlined_call_operand.hbm [shape: f32[16,128], index: 0, kind: input, shape index: {}]
  %s1 = inlined_call_operand.hbm [shape: bf16[128,128], index: 1, kind: input, shape index: {}]
  %s2 = inlined_call_operand.vmem [shape: f32[1,128], index: 2, kind: input, shape index: {}]
  %s3 = inlined_call_operand.hbm [shape: bf16[128,128], index: 3, kind: input, shape index: {}]
  %s4 = inlined_call_operand.vmem [shape: f32[1,128], index: 4, kind: input, shape index: {}]
  %s5 = inlined_call_operand.vmem [shape: f32[1,128], index: 5, kind: input, shape index: {}]
  %s6 = inlined_call_operand.vmem [shape: f32[1,128], index: 6, kind: input, shape index: {}]
  %s7 = inlined_call_operand.hbm [shape: f32[16,128], index: 7, kind: output, shape index: {}]
  %s8 = sld [smem:[#allocation0]]
  $region73: #{tpu_custom_call.1} parent=0
    _
  %s10 = ssub.s32 1, %s8
  %s11 = scalar_select 0, %s10, %s8
  $region1: #{tpu_custom_call.1} parent=0
    #allocation2 [shape = 'u8[8192]{0}', space=vmem, size = 0x2000, scoped, tag = 'input window, operand 0']
    #allocation3 [shape = 's32[2]{0}', space=sflag, size = 0x8, scoped, tag = 'scoped memory for tpu_custom_call.1']
    #allocation4 [shape = 's32[2]{0}', space=sflag, size = 0x8, scoped, tag = 'scoped memory for tpu_custom_call.1']
    #allocation5 [shape = 'u8[32768]{0}', space=vmem, size = 0x8000, scoped, tag = 'input window, operand 1, single buffered']
    #allocation6 [shape = 's32[1]{0}', space=sflag, size = 0x4, scoped, tag = 'scoped memory for tpu_custom_call.1']
    #allocation7 [shape = 'u8[32768]{0}', space=vmem, size = 0x8000, scoped, tag = 'input window, operand 3, single buffered']
    #allocation8 [shape = 'u8[8192]{0}', space=vmem, size = 0x2000, scoped, tag = 'output window, operand 0']
    %12 = vsyncpa [#allocation3], 0
    %s13 = scalar_lea.sflag [#allocation3], 1
    %14 = vsyncpa %s13, 0
    %15 = vsyncpa [#allocation6], 0
    %16 = vsyncpa [#allocation4], 0
    %s17 = scalar_lea.sflag [#allocation4], 1
    %18 = vsyncpa %s17, 0
    loop: start=0, step=1, limit=4
    $region2: #{tpu_custom_call.1} parent=1 // loop_pre_header
      _
    $region3: #{tpu_custom_call.1} parent=1 // loop_header
      %s20 = sphi 0, %s24
      %p21 = scmp.ge.s32.totalorder %s20, 4
      %s30 = sphi 0, %s32
      %s33 = sphi 0, %s30
      %s34 = sphi 0, %s33
      %s50 = sphi 0, %s34
      %s54 = sphi 0, %s54
      %s56 = sphi 0, %s54
      %s57 = sphi 0, %s56
      %s71 = sphi 0, %s57
      %s75 = sphi 0, %s75
      %s77 = sphi 0, %s75
      %s78 = sphi 0, %s77
      %s92 = sphi 0, %s78
      %s96 = sphi 0, %s96
      %s98 = sphi 0, %s96
      %s99 = sphi 0, %s98
      %s113 = sphi 0, %s99
      %s117 = sphi 0, %s117
      %s119 = sphi 0, %s117
      %s120 = sphi 0, %s119
      %s134 = sphi 0, %s120
      %s138 = sphi 0, %s138
      %s140 = sphi 0, %s138
      %s141 = sphi 0, %s140
      %s155 = sphi 0, %s141
      %s159 = sphi 0, %s159
      %s161 = sphi 0, %s159
      %s162 = sphi 0, %s161
      %s176 = sphi 0, %s162
      %s182 = sphi 0, %s184
      %s185 = sphi 0, %s182
      %s186 = sphi 0, %s185
      %s202 = sphi 0, %s186
    $region4: #{tpu_custom_call.1} parent=1 // loop_header_branch
      %23 = sbr.rel (%p21) target = $region8
    $region5: #{tpu_custom_call.1} parent=1 // loop_body
      %s25 = ssub.s32 %s20, 1
      %s26 = ssub.s32 %s20, 2
      %s27 = sadd.s32 %s20, 1
      %s28 = ssub.s32 %s20, %s27
      %p29 = scmp.eq.s32.totalorder %s28, 0
      %s31 = sadd.s32 %s30, 1
      %s32 = scalar_select %p29, %s30, %s31
      %p35 = pneg %p29
      %p36 = scmp.eq.s32.totalorder %s20, 1
      %p37 = por %p35, %p36
      %p38 = scmp.ne.s32.totalorder %s30, %s33
      %p39 = scmp.eq.s32.totalorder %s20, 0
      %p40 = por %p38, %p39
      %p41 = scmp.ne.s32.totalorder %s30, %s33
      %p42 = scmp.eq.s32.totalorder %s25, 1
      %p43 = por %p41, %p42
      %p44 = scmp.ne.s32.totalorder %s33, %s34
      %p45 = scmp.eq.s32.totalorder %s25, 0
      %p46 = por %p44, %p45
      %p47 = scmp.ne.s32.totalorder %s33, %s34
      %p48 = scmp.eq.s32.totalorder %s26, 1
      %p49 = por %p47, %p48
      %p51 = scmp.ne.s32.totalorder %s34, %s50
      %p52 = scmp.eq.s32.totalorder %s26, 0
      %p53 = por %p51, %p52
      %s55 = sadd.s32 %s54, 1
      %p58 = scmp.eq.s32.totalorder %s20, 1
      %p59 = scmp.ne.s32.totalorder %s54, %s56
      %p60 = scmp.eq.s32.totalorder %s20, 0
      %p61 = por %p59, %p60
      %p62 = scmp.ne.s32.totalorder %s54, %s56
      %p63 = scmp.eq.s32.totalorder %s25, 1
      %p64 = por %p62, %p63
      %p65 = scmp.ne.s32.totalorder %s56, %s57
      %p66 = scmp.eq.s32.totalorder %s25, 0
      %p67 = por %p65, %p66
      %p68 = scmp.ne.s32.totalorder %s56, %s57
      %p69 = scmp.eq.s32.totalorder %s26, 1
      %p70 = por %p68, %p69
      %p72 = scmp.ne.s32.totalorder %s57, %s71
      %p73 = scmp.eq.s32.totalorder %s26, 0
      %p74 = por %p72, %p73
      %s76 = sadd.s32 %s75, 1
      %p79 = scmp.eq.s32.totalorder %s20, 1
      %p80 = scmp.ne.s32.totalorder %s75, %s77
      %p81 = scmp.eq.s32.totalorder %s20, 0
      %p82 = por %p80, %p81
      %p83 = scmp.ne.s32.totalorder %s75, %s77
      %p84 = scmp.eq.s32.totalorder %s25, 1
      %p85 = por %p83, %p84
      %p86 = scmp.ne.s32.totalorder %s77, %s78
      %p87 = scmp.eq.s32.totalorder %s25, 0
      %p88 = por %p86, %p87
      %p89 = scmp.ne.s32.totalorder %s77, %s78
      %p90 = scmp.eq.s32.totalorder %s26, 1
      %p91 = por %p89, %p90
      %p93 = scmp.ne.s32.totalorder %s78, %s92
      %p94 = scmp.eq.s32.totalorder %s26, 0
      %p95 = por %p93, %p94
      %s97 = sadd.s32 %s96, 1
      %p100 = scmp.eq.s32.totalorder %s20, 1
      %p101 = scmp.ne.s32.totalorder %s96, %s98
      %p102 = scmp.eq.s32.totalorder %s20, 0
      %p103 = por %p101, %p102
      %p104 = scmp.ne.s32.totalorder %s96, %s98
      %p105 = scmp.eq.s32.totalorder %s25, 1
      %p106 = por %p104, %p105
      %p107 = scmp.ne.s32.totalorder %s98, %s99
      %p108 = scmp.eq.s32.totalorder %s25, 0
      %p109 = por %p107, %p108
      %p110 = scmp.ne.s32.totalorder %s98, %s99
      %p111 = scmp.eq.s32.totalorder %s26, 1
      %p112 = por %p110, %p111
      %p114 = scmp.ne.s32.totalorder %s99, %s113
      %p115 = scmp.eq.s32.totalorder %s26, 0
      %p116 = por %p114, %p115
      %s118 = sadd.s32 %s117, 1
      %p121 = scmp.eq.s32.totalorder %s20, 1
      %p122 = scmp.ne.s32.totalorder %s117, %s119
      %p123 = scmp.eq.s32.totalorder %s20, 0
      %p124 = por %p122, %p123
      %p125 = scmp.ne.s32.totalorder %s117, %s119
      %p126 = scmp.eq.s32.totalorder %s25, 1
      %p127 = por %p125, %p126
      %p128 = scmp.ne.s32.totalorder %s119, %s120
      %p129 = scmp.eq.s32.totalorder %s25, 0
      %p130 = por %p128, %p129
      %p131 = scmp.ne.s32.totalorder %s119, %s120
      %p132 = scmp.eq.s32.totalorder %s26, 1
      %p133 = por %p131, %p132
      %p135 = scmp.ne.s32.totalorder %s120, %s134
      %p136 = scmp.eq.s32.totalorder %s26, 0
      %p137 = por %p135, %p136
      %s139 = sadd.s32 %s138, 1
      %p142 = scmp.eq.s32.totalorder %s20, 1
      %p143 = scmp.ne.s32.totalorder %s138, %s140
      %p144 = scmp.eq.s32.totalorder %s20, 0
      %p145 = por %p143, %p144
      %p146 = scmp.ne.s32.totalorder %s138, %s140
      %p147 = scmp.eq.s32.totalorder %s25, 1
      %p148 = por %p146, %p147
      %p149 = scmp.ne.s32.totalorder %s140, %s141
      %p150 = scmp.eq.s32.totalorder %s25, 0
      %p151 = por %p149, %p150
      %p152 = scmp.ne.s32.totalorder %s140, %s141
      %p153 = scmp.eq.s32.totalorder %s26, 1
      %p154 = por %p152, %p153
      %p156 = scmp.ne.s32.totalorder %s141, %s155
      %p157 = scmp.eq.s32.totalorder %s26, 0
      %p158 = por %p156, %p157
      %s160 = sadd.s32 %s159, 1
      %p163 = scmp.eq.s32.totalorder %s20, 1
      %p164 = scmp.ne.s32.totalorder %s159, %s161
      %p165 = scmp.eq.s32.totalorder %s20, 0
      %p166 = por %p164, %p165
      %p167 = scmp.ne.s32.totalorder %s159, %s161
      %p168 = scmp.eq.s32.totalorder %s25, 1
      %p169 = por %p167, %p168
      %p170 = scmp.ne.s32.totalorder %s161, %s162
      %p171 = scmp.eq.s32.totalorder %s25, 0
      %p172 = por %p170, %p171
      %p173 = scmp.ne.s32.totalorder %s161, %s162
      %p174 = scmp.eq.s32.totalorder %s26, 1
      %p175 = por %p173, %p174
      %p177 = scmp.ne.s32.totalorder %s162, %s176
      %p178 = scmp.eq.s32.totalorder %s26, 0
      %p179 = por %p177, %p178
      %s180 = ssub.s32 %s20, %s27
      %p181 = scmp.eq.s32.totalorder %s180, 0
      %s183 = sadd.s32 %s182, 1
      %s184 = scalar_select %p181, %s182, %s183
      %p187 = pneg %p181
      %p188 = scmp.eq.s32.totalorder %s20, 1
      %p189 = por %p187, %p188
      %p190 = scmp.ne.s32.totalorder %s182, %s185
      %p191 = scmp.eq.s32.totalorder %s20, 0
      %p192 = por %p190, %p191
      %p193 = scmp.ne.s32.totalorder %s182, %s185
      %p194 = scmp.eq.s32.totalorder %s25, 1
      %p195 = por %p193, %p194
      %p196 = scmp.ne.s32.totalorder %s185, %s186
      %p197 = scmp.eq.s32.totalorder %s25, 0
      %p198 = por %p196, %p197
      %p199 = scmp.ne.s32.totalorder %s185, %s186
      %p200 = scmp.eq.s32.totalorder %s26, 1
      %p201 = por %p199, %p200
      %p203 = scmp.ne.s32.totalorder %s186, %s202
      %p204 = scmp.eq.s32.totalorder %s26, 0
      %p205 = por %p203, %p204
      %p206 = scmp.le.s32.totalorder 1, %s20
      %p207 = scmp.lt.s32.totalorder %s20, 3
      %p208 = pnand %p206, %p207
      %p209 = pneg %p208
      // Predicated region
      $region9: #{tpu_custom_call.1} parent=5 // pred_check
        _
      $region10: #{tpu_custom_call.1} parent=5 // pred_check_branch
        %211 = sbr.rel (%p208) target = $region12
      $region11: #{tpu_custom_call.1} parent=5 // pred_region
        %s212 = ssub.s32 %s20, 1
        // Predicated region
        $region13: #{tpu_custom_call.1} parent=11 // pred_check
          %p213 = pneg %p67
        $region14: #{tpu_custom_call.1} parent=11 // pred_check_branch
          %215 = sbr.rel (%p213) target = $region16
        $region15: #{tpu_custom_call.1} parent=11 // pred_region
          %217 = vsyncadd [#allocation6], 0
          %s218 = sshll.u32 %s1, 4
          %s219 = int_to_ptr.hbm [resolvable:$true] %s218
          %s220 = sshll.u32 [#allocation5], 4
          %s221 = int_to_ptr.vmem [resolvable:$true] %s220
          %226 = dma.hbm_to_vmem [thread:$0]  %s219, 1024, %s221, [#allocation6], 64, 64, 4
        $region16: #{tpu_custom_call.1} parent=11 // pred_fallthru
          _
        // Predicated region
        $region17: #{tpu_custom_call.1} parent=11 // pred_check
          %p227 = pneg %p88
        $region18: #{tpu_custom_call.1} parent=11 // pred_check_branch
          %229 = sbr.rel (%p227) target = $region20
        $region19: #{tpu_custom_call.1} parent=11 // pred_region
          _
        $region20: #{tpu_custom_call.1} parent=11 // pred_fallthru
          _
        // Predicated region
        $region21: #{tpu_custom_call.1} parent=11 // pred_check
          %p230 = pneg %p109
        $region22: #{tpu_custom_call.1} parent=11 // pred_check_branch
          %232 = sbr.rel (%p230) target = $region24
        $region23: #{tpu_custom_call.1} parent=11 // pred_region
          %234 = vsyncadd [#allocation6], 0
          %s235 = sshll.u32 %s3, 4
          %s236 = int_to_ptr.hbm [resolvable:$true] %s235
          %s237 = sshll.u32 [#allocation7], 4
          %s238 = int_to_ptr.vmem [resolvable:$true] %s237
          %243 = dma.hbm_to_vmem [thread:$0]  %s236, 1024, %s238, [#allocation6], 64, 64, 4
        $region24: #{tpu_custom_call.1} parent=11 // pred_fallthru
          _
        // Predicated region
        $region25: #{tpu_custom_call.1} parent=11 // pred_check
          %p244 = pneg %p130
        $region26: #{tpu_custom_call.1} parent=11 // pred_check_branch
          %246 = sbr.rel (%p244) target = $region28
        $region27: #{tpu_custom_call.1} parent=11 // pred_region
          _
        $region28: #{tpu_custom_call.1} parent=11 // pred_fallthru
          _
        // Predicated region
        $region29: #{tpu_custom_call.1} parent=11 // pred_check
          %p247 = pneg %p151
        $region30: #{tpu_custom_call.1} parent=11 // pred_check_branch
          %249 = sbr.rel (%p247) target = $region32
        $region31: #{tpu_custom_call.1} parent=11 // pred_region
          _
        $region32: #{tpu_custom_call.1} parent=11 // pred_fallthru
          _
        // Predicated region
        $region33: #{tpu_custom_call.1} parent=11 // pred_check
          %p250 = pneg %p172
        $region34: #{tpu_custom_call.1} parent=11 // pred_check_branch
          %252 = sbr.rel (%p250) target = $region36
        $region35: #{tpu_custom_call.1} parent=11 // pred_region
          _
        $region36: #{tpu_custom_call.1} parent=11 // pred_fallthru
          _
      $region12: #{tpu_custom_call.1} parent=5 // pred_fallthru
        _
      %p253 = scmp.lt.s32.totalorder %s20, 2
      // Predicated region
      $region37: #{tpu_custom_call.1} parent=5 // pred_check
        %p254 = pneg %p253
      $region38: #{tpu_custom_call.1} parent=5 // pred_check_branch
        %256 = sbr.rel (%p254) target = $region40
      $region39: #{tpu_custom_call.1} parent=5 // pred_region
        // Predicated region
        $region41: #{tpu_custom_call.1} parent=39 // pred_check
          %p257 = pneg %p40
        $region42: #{tpu_custom_call.1} parent=39 // pred_check_branch
          %259 = sbr.rel (%p257) target = $region44
        $region43: #{tpu_custom_call.1} parent=39 // pred_region
          %s260 = sand.u32 %s30, 1
          %s261 = scalar_lea.sflag [#allocation3], %s260
          %s262 = sand.u32 %s30, 1
          %s263 = smul.addr %s262, 8
          %s264 = scalar_lea.vmem [#allocation2], %s263
          %266 = vsyncadd %s261, 0
          %s267 = smul.addr %s20, 8
          %s268 = scalar_lea.hbm %s0, %s267
          %s270 = sshll.u32 %s268, 4
          %s271 = int_to_ptr.hbm [resolvable:$true] %s270
          %s272 = sshll.u32 %s264, 4
          %s273 = int_to_ptr.vmem [resolvable:$true] %s272
          %275 = dma.hbm_to_vmem [thread:$0]  %s271, 128, %s273, %s261
        $region44: #{tpu_custom_call.1} parent=39 // pred_fallthru
          _
      $region40: #{tpu_custom_call.1} parent=5 // pred_fallthru
        _
      %p276 = scmp.le.s32.totalorder 1, %s20
      %p277 = scmp.lt.s32.totalorder %s20, 3
      %p278 = pnand %p276, %p277
      %p279 = pneg %p278
      // Predicated region
      $region45: #{tpu_custom_call.1} parent=5 // pred_check
        _
      $region46: #{tpu_custom_call.1} parent=5 // pred_check_branch
        %281 = sbr.rel (%p278) target = $region48
      $region47: #{tpu_custom_call.1} parent=5 // pred_region
        %s282 = ssub.s32 %s20, 1
        %s283 = sand.u32 %s33, 1
        %s284 = scalar_lea.sflag [#allocation3], %s283
        %s285 = sand.u32 %s33, 1
        %s286 = smul.addr %s285, 8
        %s287 = scalar_lea.vmem [#allocation2], %s286
        // Predicated region
        $region49: #{tpu_custom_call.1} parent=47 // pred_check
          %p288 = pneg %p46
        $region50: #{tpu_custom_call.1} parent=47 // pred_check_branch
          %290 = sbr.rel (%p288) target = $region52
        $region51: #{tpu_custom_call.1} parent=47 // pred_region
          %292 = dma.done %s284, 128
        $region52: #{tpu_custom_call.1} parent=47 // pred_fallthru
          _
        // Predicated region
        $region53: #{tpu_custom_call.1} parent=47 // pred_check
          %p293 = pneg %p67
        $region54: #{tpu_custom_call.1} parent=47 // pred_check_branch
          %295 = sbr.rel (%p293) target = $region56
        $region55: #{tpu_custom_call.1} parent=47 // pred_region
          %297 = dma.done [#allocation6], 1024
        $region56: #{tpu_custom_call.1} parent=47 // pred_fallthru
          _
        // Predicated region
        $region57: #{tpu_custom_call.1} parent=47 // pred_check
          %p298 = pneg %p109
        $region58: #{tpu_custom_call.1} parent=47 // pred_check_branch
          %300 = sbr.rel (%p298) target = $region60
        $region59: #{tpu_custom_call.1} parent=47 // pred_region
          %302 = dma.done [#allocation6], 1024
        $region60: #{tpu_custom_call.1} parent=47 // pred_fallthru
          _
        %s303 = sand.u32 %s33, 1
        %s304 = scalar_lea.sflag [#allocation3], %s303
        %s305 = sand.u32 %s33, 1
        %s306 = smul.addr %s305, 8
        %s307 = scalar_lea.vmem [#allocation2], %s306
        %p308 = pneg %p46
        %p309 = pneg %p43
        %p310 = pneg %p67
        %p311 = pneg %p64
        %p312 = pneg %p88
        %p313 = pneg %p85
        %p314 = pneg %p109
        %p315 = pneg %p106
        %p316 = pneg %p130
        %p317 = pneg %p127
        %p318 = pneg %p151
        %p319 = pneg %p148
        %p320 = pneg %p172
        %p321 = pneg %p169
        %p322 = pneg %p198
        %p323 = pneg %p195
        %s324 = sand.u32 %s185, 1
        %s325 = scalar_lea.sflag [#allocation4], %s324
        %s326 = sand.u32 %s185, 1
        %s327 = smul.addr %s326, 8
        %s328 = scalar_lea.vmem [#allocation8], %s327
        %v329 = vld [vmem:[%s287] sm:$0xff]
        %v330 = vpack.c.bf16 %v329, %v329
        %v331 = vld [vmem:[#allocation5] sm:$0xf]
        %v332 = vld [vmem:[#allocation5 + $0x4] sm:$0xf]
        %v333 = vld [vmem:[#allocation5 + $0x8] sm:$0xf]
        %v334 = vld [vmem:[#allocation5 + $0xc] sm:$0xf]
        %v335 = vld [vmem:[#allocation5 + $0x10] sm:$0xf]
        %v336 = vld [vmem:[#allocation5 + $0x14] sm:$0xf]
        %v337 = vld [vmem:[#allocation5 + $0x18] sm:$0xf]
        %v338 = vld [vmem:[#allocation5 + $0x1c] sm:$0xf]
        %v339 = vld [vmem:[#allocation5 + $0x20] sm:$0xf]
        %v340 = vld [vmem:[#allocation5 + $0x24] sm:$0xf]
        %v341 = vld [vmem:[#allocation5 + $0x28] sm:$0xf]
        %v342 = vld [vmem:[#allocation5 + $0x2c] sm:$0xf]
        %v343 = vld [vmem:[#allocation5 + $0x30] sm:$0xf]
        %v344 = vld [vmem:[#allocation5 + $0x34] sm:$0xf]
        %v345 = vld [vmem:[#allocation5 + $0x38] sm:$0xf]
        %v346 = vld [vmem:[#allocation5 + $0x3c] sm:$0xf]
        %v347 = vld [vmem:[%s2] sm:$0x1]
        %v349 = vperm.slane %v347, 0
        %v367 = vunpack.c.l.b16 %v331
        %v368 = vunpack.c.l.b16 %v332
        %v369 = vunpack.c.l.b16 %v333
        %v370 = vunpack.c.l.b16 %v334
        %v371 = vunpack.c.l.b16 %v335
        %v372 = vunpack.c.l.b16 %v336
        %v373 = vunpack.c.l.b16 %v337
        %v374 = vunpack.c.l.b16 %v338
        %v375 = vunpack.c.l.b16 %v339
        %v376 = vunpack.c.l.b16 %v340
        %v377 = vunpack.c.l.b16 %v341
        %v378 = vunpack.c.l.b16 %v342
        %v379 = vunpack.c.l.b16 %v343
        %v380 = vunpack.c.l.b16 %v344
        %v381 = vunpack.c.l.b16 %v345
        %v382 = vunpack.c.l.b16 %v346
        %v383 = vpack.c.b16 %v368, %v367
        %v384 = vpack.c.b16 %v370, %v369
        %v385 = vpack.c.b16 %v372, %v371
        %v386 = vpack.c.b16 %v374, %v373
        %v387 = vpack.c.b16 %v376, %v375
        %v388 = vpack.c.b16 %v378, %v377
        %v389 = vpack.c.b16 %v380, %v379
        %v390 = vpack.c.b16 %v382, %v381
        %399 = vmatpush.bf16.msra.mxu0 %v390
        %400 = vmatpush.bf16.msra.mxu0 %v389
        %401 = vmatpush.bf16.msra.mxu0 %v388
        %402 = vmatpush.bf16.msra.mxu0 %v387
        %403 = vmatpush.bf16.msra.mxu0 %v386
        %404 = vmatpush.bf16.msra.mxu0 %v385
        %405 = vmatpush.bf16.msra.mxu0 %v384
        %406 = vmatpush.bf16.msra.mxu0 %v383
        %407 = vmatmul.bf16.gmra.mxu0 %v330
        %v408 = vpop.f32.mrf.mxu0
        %v409 = vadd.f32 %v349, %v408
        %v410 = vpop.f32.mrf.mxu0
        %411 = vdwg.mxu0
        %v412 = vmax.f32 %v409, 0.0
        %v413 = vpack.c.bf16 %v412, %v412
        %v414 = vld [vmem:[#allocation7] sm:$0xf]
        %v415 = vld [vmem:[#allocation7 + $0x4] sm:$0xf]
        %v416 = vld [vmem:[#allocation7 + $0x8] sm:$0xf]
        %v417 = vld [vmem:[#allocation7 + $0xc] sm:$0xf]
        %v418 = vld [vmem:[#allocation7 + $0x10] sm:$0xf]
        %v419 = vld [vmem:[#allocation7 + $0x14] sm:$0xf]
        %v420 = vld [vmem:[#allocation7 + $0x18] sm:$0xf]
        %v421 = vld [vmem:[#allocation7 + $0x1c] sm:$0xf]
        %v422 = vld [vmem:[#allocation7 + $0x20] sm:$0xf]
        %v423 = vld [vmem:[#allocation7 + $0x24] sm:$0xf]
        %v424 = vld [vmem:[#allocation7 + $0x28] sm:$0xf]
        %v425 = vld [vmem:[#allocation7 + $0x2c] sm:$0xf]
        %v426 = vld [vmem:[#allocation7 + $0x30] sm:$0xf]
        %v427 = vld [vmem:[#allocation7 + $0x34] sm:$0xf]
        %v428 = vld [vmem:[#allocation7 + $0x38] sm:$0xf]
        %v429 = vld [vmem:[#allocation7 + $0x3c] sm:$0xf]
        %v430 = vld [vmem:[%s4] sm:$0x1]
        %v432 = vperm.slane %v430, 0
        %v450 = vunpack.c.l.b16 %v414
        %v451 = vunpack.c.l.b16 %v415
        %v452 = vunpack.c.l.b16 %v416
        %v453 = vunpack.c.l.b16 %v417
        %v454 = vunpack.c.l.b16 %v418
        %v455 = vunpack.c.l.b16 %v419
        %v456 = vunpack.c.l.b16 %v420
        %v457 = vunpack.c.l.b16 %v421
        %v458 = vunpack.c.l.b16 %v422
        %v459 = vunpack.c.l.b16 %v423
        %v460 = vunpack.c.l.b16 %v424
        %v461 = vunpack.c.l.b16 %v425
        %v462 = vunpack.c.l.b16 %v426
        %v463 = vunpack.c.l.b16 %v427
        %v464 = vunpack.c.l.b16 %v428
        %v465 = vunpack.c.l.b16 %v429
        %v466 = vpack.c.b16 %v451, %v450
        %v467 = vpack.c.b16 %v453, %v452
        %v468 = vpack.c.b16 %v455, %v454
        %v469 = vpack.c.b16 %v457, %v456
        %v470 = vpack.c.b16 %v459, %v458
        %v471 = vpack.c.b16 %v461, %v460
        %v472 = vpack.c.b16 %v463, %v462
        %v473 = vpack.c.b16 %v465, %v464
        %482 = vmatpush.bf16.msra.mxu0 %v473
        %483 = vmatpush.bf16.msra.mxu0 %v472
        %484 = vmatpush.bf16.msra.mxu0 %v471
        %485 = vmatpush.bf16.msra.mxu0 %v470
        %486 = vmatpush.bf16.msra.mxu0 %v469
        %487 = vmatpush.bf16.msra.mxu0 %v468
        %488 = vmatpush.bf16.msra.mxu0 %v467
        %489 = vmatpush.bf16.msra.mxu0 %v466
        %490 = vmatmul.bf16.gmra.mxu0 %v413
        %v491 = vpop.f32.mrf.mxu0
        %v492 = vadd.f32 %v432, %v491
        %v493 = vpop.f32.mrf.mxu0
        %494 = vdwg.mxu0
        %v495 = vadd.f32 %v492, %v329
        %v496 = vld [vmem:[%s5] sm:$0x1]
        %v497 = vld [vmem:[%s6] sm:$0x1]
        %498 = vadd.xlane.f32.xlu0 %v495
        %v499 = vpop.xlane.xlu0 %498
        %v500 = vmul.f32 %v499, 0.03125
        %v501 = vsub.f32 %v495, %v500
        %v502 = vlaneseq
        %v503 = vand.u32 %v502, 127
        %vm504 = vcmp.lt.s32.totalorder %v503, 32
        %v505 = vsel %vm504, %v501, 0.0
        %v506 = vmul.f32 %v505, %v505
        %507 = vadd.xlane.f32.xlu0 %v506
        %v508 = vpop.xlane.xlu0 %507
        %v509 = vmul.f32 %v508, 0.03125
        %v510 = vadd.f32 %v509, 1e-05
        %v511 = vrsqrt.pop %v510
        %v512 = vmul.f32 %v511, %v510
        %v513 = vmul.f32 %v512, %v511
        %v514 = vmul.f32 0.5, %v513
        %v515 = vsub.f32 1.5, %v514
        %v516 = vmul.f32 %v511, %v515
        %vm517 = vweird.f32 %v510
        %vm518 = vweird.f32 %v511
        %vm519 = vmor %vm517, %vm518
        %v520 = vsel %vm519, %v511, %v516
        %v522 = vperm.slane %v496, 0
        %v524 = vmul.f32 %v520, %v522
        %v525 = vmul.f32 %v505, %v524
        %v527 = vperm.slane %v497, 0
        %v529 = vadd.f32 %v525, %v527
        %530 = vst [vmem:[%s328] sm:$0xff] %v529
        %s531 = sand.u32 %s185, 1
        %s532 = scalar_lea.sflag [#allocation4], %s531
        %s533 = sand.u32 %s185, 1
        %s534 = smul.addr %s533, 8
        %s535 = scalar_lea.vmem [#allocation8], %s534
        // Predicated region
        $region61: #{tpu_custom_call.1} parent=47 // pred_check
          %p536 = pneg %p195
        $region62: #{tpu_custom_call.1} parent=47 // pred_check_branch
          %538 = sbr.rel (%p536) target = $region64
        $region63: #{tpu_custom_call.1} parent=47 // pred_region
          %540 = vsyncadd %s532, 0
          %s541 = smul.addr %s25, 8
          %s542 = scalar_lea.hbm %s7, %s541
          %s544 = sshll.u32 %s535, 4
          %s545 = int_to_ptr.vmem [resolvable:$true] %s544
          %s546 = sshll.u32 %s542, 4
          %s547 = int_to_ptr.hbm [resolvable:$true] %s546
          %549 = dma.vmem_to_hbm [thread:$0]  %s545, 128, %s547, %s532
        $region64: #{tpu_custom_call.1} parent=47 // pred_fallthru
          _
      $region48: #{tpu_custom_call.1} parent=5 // pred_fallthru
        _
      %p550 = scmp.le.s32.totalorder 2, %s20
      // Predicated region
      $region65: #{tpu_custom_call.1} parent=5 // pred_check
        %p551 = pneg %p550
      $region66: #{tpu_custom_call.1} parent=5 // pred_check_branch
        %553 = sbr.rel (%p551) target = $region68
      $region67: #{tpu_custom_call.1} parent=5 // pred_region
        %s554 = ssub.s32 %s20, 2
        // Predicated region
        $region69: #{tpu_custom_call.1} parent=67 // pred_check
          %p555 = pneg %p201
        $region70: #{tpu_custom_call.1} parent=67 // pred_check_branch
          %557 = sbr.rel (%p555) target = $region72
        $region71: #{tpu_custom_call.1} parent=67 // pred_region
          %s558 = sand.u32 %s186, 1
          %s559 = scalar_lea.sflag [#allocation4], %s558
          %s560 = sand.u32 %s186, 1
          %s561 = smul.addr %s560, 8
          %s562 = scalar_lea.vmem [#allocation8], %s561
          %564 = dma.done %s559, 128
        $region72: #{tpu_custom_call.1} parent=67 // pred_fallthru
          _
      $region68: #{tpu_custom_call.1} parent=5 // pred_fallthru
        _
    $region6: #{tpu_custom_call.1} parent=1 // loop_footer
      %s24 = sadd.s32 1, %s20
    $region7: #{tpu_custom_call.1} parent=1 // loop_footer_branch
      %19 = sbr.rel target = $region3
    $region8: #{tpu_custom_call.1} parent=1 // loop_exit
      _
    %565 = vsyncpa [#allocation3], 1
    %s566 = scalar_lea.sflag [#allocation3], 1
    %567 = vsyncpa %s566, 1
    %568 = vsyncpa [#allocation6], 1
    %569 = vsyncpa [#allocation4], 1
    %s570 = scalar_lea.sflag [#allocation4], 1
    %571 = vsyncpa %s570, 1

</llo_original>
